<compile_context>
chip_gen: v7x
topology: tpu7x:2x2x1
jax: 0.10.0
libtpu: 0.0.40
codegen_flags: <defaults>
</compile_context>

<pallas_src>
import functools

import jax
import jax.numpy as jnp
import numpy as np
from jax.experimental import pallas as pl
from jax.experimental.pallas import tpu as pltpu


# ----------------------------------------------------------------------------
# Config (scaled-down ViT; real BiomedCLIP: img=224, dim=768, heads=12, depth=12)
# ----------------------------------------------------------------------------
CFG = dict(
    img=32,        # image size (real: 224)
    patch=16,      # patch size (same as real model)
    in_ch=3,
    dim=64,        # hidden dim (real: 768)
    heads=4,       # (real: 12)
    mlp=256,       # mlp hidden (real: 3072)
    depth=2,       # (real: 12)
    embed=32,      # projection head output (real: 512)
)
LN_EPS = 1e-6      # timm ViT LayerNorm epsilon


def _ln(x, g, b, eps):
    """f32 layernorm over the last (lane) dim."""
    mu = jnp.mean(x, axis=-1, keepdims=True)
    var = jnp.mean((x - mu) ** 2, axis=-1, keepdims=True)
    return (x - mu) * jax.lax.rsqrt(var + eps) * g + b


# ----------------------------------------------------------------------------
# Kernel 1: patch embedding (conv-as-matmul) + cls/pos/bias fused via `add`
# ----------------------------------------------------------------------------
def _embed_kernel(p_ref, w_ref, add_ref, o_ref):
    # p_ref: (1, Tp, K) bf16 (row 0 and pad rows are zero)
    # add_ref: (Tp, D) f32, rows = [cls+pos0 ; patch_b+pos[1:T] ; 0]
    emb = jnp.dot(p_ref[0], w_ref[...], preferred_element_type=jnp.float32)
    o_ref[0] = (emb + add_ref[...]).astype(o_ref.dtype)


def pallas_embed(patches_pad, patch_w, add_const):
    B, Tp, K = patches_pad.shape
    D = patch_w.shape[1]
    return pl.pallas_call(
        _embed_kernel,
        out_shape=jax.ShapeDtypeStruct((B, Tp, D), jnp.bfloat16),
        grid=(B,),
        in_specs=[
            pl.BlockSpec((1, Tp, K), lambda b: (b, 0, 0)),
            pl.BlockSpec((K, D), lambda b: (0, 0)),
            pl.BlockSpec((Tp, D), lambda b: (0, 0)),
        ],
        out_specs=pl.BlockSpec((1, Tp, D), lambda b: (b, 0, 0)),
        compiler_params=pltpu.CompilerParams(dimension_semantics=("parallel",)),
    )(patches_pad, patch_w, add_const)


# ----------------------------------------------------------------------------
# Kernel 2: one fully fused transformer block (attention + MLP + residuals)
# ----------------------------------------------------------------------------
def _block_kernel(tok_ref, ln1_g, ln1_b, qkv_w, qkv_b, proj_w, proj_b,
                  ln2_g, ln2_b, fc1_w, fc1_b, fc2_w, fc2_b, o_ref,
                  *, heads, t_real, eps):
    x = tok_ref[0].astype(jnp.float32)          # (Tp, D) residual stream
    Tp, D = x.shape
    Dh = D // heads
    scale = Dh ** -0.5

    # ---- LN1 + QKV projection (bf16 MXU operands, f32 accumulation) ----
    h = _ln(x, ln1_g[...], ln1_b[...], eps)
    qkv = jnp.dot(h.astype(jnp.bfloat16), qkv_w[...],
                  preferred_element_type=jnp.float32) + qkv_b[...]   # (Tp, 3D)
    q = qkv[:, 0:D]
    k = qkv[:, D:2 * D]
    v = qkv[:, 2 * D:3 * D]

    # key-padding mask: columns >= t_real are padding tokens
    col = jax.lax.broadcasted_iota(jnp.int32, (Tp, Tp), 1)
    key_mask = col < t_real

    # ---- multi-head attention, all heads in this kernel, lane-dense output ----
    outs = []
    for hd in range(heads):
        sl = slice(hd * Dh, (hd + 1) * Dh)
        qh = q[:, sl].astype(jnp.bfloat16)
        kh = k[:, sl].astype(jnp.bfloat16)
        vh = v[:, sl].astype(jnp.bfloat16)
        # q @ k^T via dot_general contracting last dims (no explicit transpose)
        s = jax.lax.dot_general(qh, kh, (((1,), (1,)), ((), ())),
                                preferred_element_type=jnp.float32) * scale
        s = jnp.where(key_mask, s, jnp.float32(-1e30))
        s = s - jnp.max(s, axis=-1, keepdims=True)
        p = jnp.exp(s)
        p = p * pl.reciprocal(jnp.sum(p, axis=-1, keepdims=True), approx=True)
        outs.append(jnp.dot(p.astype(jnp.bfloat16), vh,
                            preferred_element_type=jnp.float32))
    attn = jnp.concatenate(outs, axis=-1)        # (Tp, D)

    # ---- output projection + fused residual add ----
    proj = jnp.dot(attn.astype(jnp.bfloat16), proj_w[...],
                   preferred_element_type=jnp.float32) + proj_b[...]
    x = x + proj

    # ---- LN2 + MLP (GELU) + fused residual add ----
    h = _ln(x, ln2_g[...], ln2_b[...], eps)
    h1 = jnp.dot(h.astype(jnp.bfloat16), fc1_w[...],
                 preferred_element_type=jnp.float32) + fc1_b[...]
    h1 = 0.5 * h1 * (1.0 + jax.lax.erf(h1 * 0.7071067811865476))  # exact GELU
    h2 = jnp.dot(h1.astype(jnp.bfloat16), fc2_w[...],
                 preferred_element_type=jnp.float32) + fc2_b[...]
    x = x + h2

    o_ref[0] = x.astype(o_ref.dtype)


def pallas_block(tok, blk, heads, t_real, eps=LN_EPS):
    B, Tp, D = tok.shape
    M = blk["fc1_w"].shape[1]
    kernel = functools.partial(_block_kernel, heads=heads, t_real=t_real, eps=eps)
    tok_spec = pl.BlockSpec((1, Tp, D), lambda b: (b, 0, 0))
    w = lambda shape: pl.BlockSpec(shape, lambda b: (0, 0))
    return pl.pallas_call(
        kernel,
        out_shape=jax.ShapeDtypeStruct((B, Tp, D), jnp.bfloat16),
        grid=(B,),
        in_specs=[
            tok_spec,
            w((1, D)), w((1, D)),
            w((D, 3 * D)), w((1, 3 * D)),
            w((D, D)), w((1, D)),
            w((1, D)), w((1, D)),
            w((D, M)), w((1, M)),
            w((M, D)), w((1, D)),
        ],
        out_specs=tok_spec,
        compiler_params=pltpu.CompilerParams(dimension_semantics=("parallel",)),
    )(tok, blk["ln1_g"], blk["ln1_b"], blk["qkv_w"], blk["qkv_b"],
      blk["proj_w"], blk["proj_b"], blk["ln2_g"], blk["ln2_b"],
      blk["fc1_w"], blk["fc1_b"], blk["fc2_w"], blk["fc2_b"])


# ----------------------------------------------------------------------------
# Kernel 3: final LN (cls row only) + projection head + L2 normalize
# ----------------------------------------------------------------------------
def _head_kernel(tok_ref, g_ref, b_ref, w_ref, o_ref, *, eps):
    tok = tok_ref[...].astype(jnp.float32)       # (B, Tp, D)
    cls = tok[:, 0, :]                           # (B, D) cls token only
    h = _ln(cls, g_ref[...], b_ref[...], eps)
    feat = jnp.dot(h.astype(jnp.bfloat16), w_ref[...],
                   preferred_element_type=jnp.float32)               # (B, E)
    inv = jax.lax.rsqrt(jnp.sum(feat * feat, axis=-1, keepdims=True) + 1e-12)
    o_ref[...] = (feat * inv).astype(o_ref.dtype)


def pallas_head(tok, norm_g, norm_b, head_w, eps=LN_EPS):
    B, Tp, D = tok.shape
    E = head_w.shape[1]
    kernel = functools.partial(_head_kernel, eps=eps)
    return pl.pallas_call(
        kernel,
        out_shape=jax.ShapeDtypeStruct((B, E), jnp.float32),
        grid=(1,),
        in_specs=[
            pl.BlockSpec((B, Tp, D), lambda i: (0, 0, 0)),
            pl.BlockSpec((1, D), lambda i: (0, 0)),
            pl.BlockSpec((1, D), lambda i: (0, 0)),
            pl.BlockSpec((D, E), lambda i: (0, 0)),
        ],
        out_specs=pl.BlockSpec((B, E), lambda i: (0, 0)),
    )(tok, norm_g, norm_b, head_w)


# ----------------------------------------------------------------------------
# Deterministic parameter init (weights bf16 for the MXU, LN/bias f32)
# ----------------------------------------------------------------------------
def init_params(key, cfg):
    cnt = [0]

    def nxt():
        cnt[0] += 1
        return jax.random.fold_in(key, cnt[0])

    def normal(shape, std=0.02, dtype=jnp.float32):
        return (std * jax.random.normal(nxt(), shape)).astype(dtype)

    D, C, P, E = cfg["dim"], cfg["in_ch"], cfg["patch"], cfg["embed"]
    K = C * P * P
    N = (cfg["img"] // P) ** 2
    T = N + 1
    bf = jnp.bfloat16
    p = {
        "patch_w": normal((K, D), dtype=bf),   # conv weight flattened (C,ph,pw) x D
        "patch_b": normal((1, D)),
        "cls": normal((1, D)),
        "pos": normal((T, D)),
        "norm_g": jnp.ones((1, D), jnp.float32),
        "norm_b": jnp.zeros((1, D), jnp.float32),
        "head_w": normal((D, E), dtype=bf),    # linear head, no bias
        "blocks": [],
    }
    for _ in range(cfg["depth"]):
        p["blocks"].append({
            "ln1_g": jnp.ones((1, D), jnp.float32), "ln1_b": jnp.zeros((1, D), jnp.float32),
            "qkv_w": normal((D, 3 * D), dtype=bf), "qkv_b": normal((1, 3 * D)),
            "proj_w": normal((D, D), dtype=bf), "proj_b": normal((1, D)),
            "ln2_g": jnp.ones((1, D), jnp.float32), "ln2_b": jnp.zeros((1, D), jnp.float32),
            "fc1_w": normal((D, cfg["mlp"]), dtype=bf), "fc1_b": normal((1, cfg["mlp"])),
            "fc2_w": normal((cfg["mlp"], D), dtype=bf), "fc2_b": normal((1, D)),
        })
    return p


# ----------------------------------------------------------------------------
# Forward pass (thin JAX glue: patch extraction + padding; everything else Pallas)
# ----------------------------------------------------------------------------
def extract_patches(x, patch):
    # x: (B, C, H, W) -> (B, N, C*patch*patch), flattened in (C, ph, pw) order
    B, C, H, W = x.shape
    gh, gw = H // patch, W // patch
    x = x.reshape(B, C, gh, patch, gw, patch)
    x = x.transpose(0, 2, 4, 1, 3, 5)
    return x.reshape(B, gh * gw, C * patch * patch)


def biomedclip_forward(params, x, cfg):
    B = x.shape[0]
    D, H = cfg["dim"], cfg["heads"]
    patches = extract_patches(x, cfg["patch"])           # (B, N, K) f32
    _, N, K = patches.shape
    T = N + 1
    Tp = ((T + 7) // 8) * 8                              # sublane-pad token count

    # padded patch rows: row 0 reserved for cls, trailing rows are zero padding
    pp = jnp.zeros((B, Tp, K), jnp.bfloat16)
    pp = pp.at[:, 1:T, :].set(patches.astype(jnp.bfloat16))

    # batch-independent additive constant folded into the embed kernel:
    #   row 0 = cls + pos[0];  rows 1..N = patch bias + pos[1:T];  pad rows = 0
    add = jnp.zeros((Tp, D), jnp.float32)
    add = add.at[0:1, :].set(params["cls"] + params["pos"][0:1, :])
    add = add.at[1:T, :].set(params["patch_b"] + params["pos"][1:T, :])

    tok = pallas_embed(pp, params["patch_w"], add)       # (B, Tp, D) bf16
    for blk in params["blocks"]:
        tok = pallas_block(tok, blk, H, T)               # one fused kernel / block
    # final LN (cls row only) + head + L2 normalize, one kernel
    return pallas_head(tok, params["norm_g"], params["norm_b"], params["head_w"])


# ----------------------------------------------------------------------------
# Pure-JAX (f32) reference for a sanity check
# ----------------------------------------------------------------------------
def reference_forward(params, x, cfg):
    B = x.shape[0]
    D, H = cfg["dim"], cfg["heads"]
    Dh = D // H
    scale = Dh ** -0.5
    f32 = lambda a: a.astype(jnp.float32)

    def ln(z, g, b, eps=LN_EPS):
        mu = jnp.mean(z, -1, keepdims=True)
        var = jnp.mean((z - mu) ** 2, -1, keepdims=True)
        return (z - mu) * jax.lax.rsqrt(var + eps) * g + b

    patches = extract_patches(x, cfg["patch"])
    N = patches.shape[1]
    tok = patches @ f32(params["patch_w"]) + params["patch_b"]
    cls = jnp.broadcast_to(params["cls"][None], (B, 1, D))
    tok = jnp.concatenate([cls, tok], 1) + params["pos"][None]
    T = N + 1
    for blk in params["blocks"]:
        h = ln(tok, blk["ln1_g"], blk["ln1_b"])
        qkv = h @ f32(blk["qkv_w"]) + blk["qkv_b"]
        qkv = qkv.reshape(B, T, 3, H, Dh).transpose(2, 0, 3, 1, 4)
        q, k, v = qkv[0], qkv[1], qkv[2]
        s = jnp.einsum("bhqd,bhkd->bhqk", q, k) * scale
        p = jax.nn.softmax(s, axis=-1)
        a = jnp.einsum("bhqk,bhkd->bhqd", p, v).transpose(0, 2, 1, 3).reshape(B, T, D)
        tok = tok + a @ f32(blk["proj_w"]) + blk["proj_b"]
        h = ln(tok, blk["ln2_g"], blk["ln2_b"])
        h = jax.nn.gelu(h @ f32(blk["fc1_w"]) + blk["fc1_b"], approximate=False)
        tok = tok + h @ f32(blk["fc2_w"]) + blk["fc2_b"]
    tok = ln(tok, params["norm_g"], params["norm_b"])
    feat = tok[:, 0, :] @ f32(params["head_w"])
    return feat / jnp.linalg.norm(feat, axis=-1, keepdims=True)


# ----------------------------------------------------------------------------
if __name__ == "__main__":
    key = jax.random.PRNGKey(0)
    params = init_params(key, CFG)

    # input image, PyTorch NCHW layout
    x = jax.random.normal(jax.random.fold_in(key, 999),
                          (2, CFG["in_ch"], CFG["img"], CFG["img"]), jnp.float32)

    fwd = jax.jit(functools.partial(biomedclip_forward, cfg=CFG))
    out = jax.block_until_ready(fwd(params, x))
    ref = jax.block_until_ready(reference_forward(params, x, CFG))

    assert out.shape == (2, CFG["embed"]), out.shape
    assert not bool(jnp.any(jnp.isnan(out)))
    # outputs are unit-norm vectors; tolerance accounts for bf16 MXU operands
    np.testing.assert_allclose(np.asarray(out), np.asarray(ref), atol=2e-2, rtol=2e-2)
    np.testing.assert_allclose(np.asarray(jnp.linalg.norm(out, axis=-1)), 1.0, atol=1e-3)

    print("KERNEL_OK")
</pallas_src>

<mosaic_0001>
module attributes {stable_mosaic.version = 11 : i64} {
  func.func @_embed_kernel(%arg0: i32, %arg1: memref<1x8x768xbf16, #tpu.memory_space<vmem>>, %arg2: memref<768x64xbf16, #tpu.memory_space<vmem>>, %arg3: memref<8x64xf32, #tpu.memory_space<vmem>>, %arg4: memref<1x8x64xbf16, #tpu.memory_space<vmem>>) attributes {dimension_semantics = [#tpu.dimension_semantics<parallel>], iteration_bounds = array<i64: 2>, scalar_prefetch = 0 : i64, scratch_operands = 0 : i64, tpu.core_type = #tpu.core_type<tc>, window_params = [{transform_indices = @transform_0, window_bounds = array<i64: 1, 8, 768>}, {pipeline_mode = #tpu.pipeline_mode<synchronous>, transform_indices = @transform_1, window_bounds = array<i64: 768, 64>}, {pipeline_mode = #tpu.pipeline_mode<synchronous>, transform_indices = @transform_2, window_bounds = array<i64: 8, 64>}, {transform_indices = @transform_3, window_bounds = array<i64: 1, 8, 64>}]} {
    %c0 = arith.constant 0 : index
    %c0_0 = arith.constant 0 : index
    %c0_1 = arith.constant 0 : index
    %0 = vector.load %arg1[%c0, %c0_0, %c0_1] : memref<1x8x768xbf16, #tpu.memory_space<vmem>>, vector<1x8x768xbf16>
    %1 = vector.shape_cast %0 : vector<1x8x768xbf16> to vector<8x768xbf16>
    %c0_2 = arith.constant 0 : index
    %c0_3 = arith.constant 0 : index
    %2 = vector.load %arg2[%c0_2, %c0_3] : memref<768x64xbf16, #tpu.memory_space<vmem>>, vector<768x64xbf16>
    %cst = arith.constant dense<0.000000e+00> : vector<8x64xf32>
    %3 = tpu.matmul %1, %2, %cst {dimension_numbers = #tpu.dot_dimension_numbers<[1], [0], [0], [1], [0, 0, 1, 1], [], []>} : vector<8x768xbf16>, vector<768x64xbf16>, vector<8x64xf32> -> vector<8x64xf32>
    %c0_4 = arith.constant 0 : index
    %c0_5 = arith.constant 0 : index
    %4 = vector.load %arg3[%c0_4, %c0_5] : memref<8x64xf32, #tpu.memory_space<vmem>>, vector<8x64xf32>
    %5 = arith.addf %3, %4 : vector<8x64xf32>
    %6 = arith.truncf %5 : vector<8x64xf32> to vector<8x64xbf16>
    %c0_6 = arith.constant 0 : index
    %c0_7 = arith.constant 0 : index
    %c0_8 = arith.constant 0 : index
    %7 = vector.load %arg4[%c0_6, %c0_7, %c0_8] : memref<1x8x64xbf16, #tpu.memory_space<vmem>>, vector<1x8x64xbf16>
    %8 = vector.shape_cast %7 : vector<1x8x64xbf16> to vector<8x64xbf16>
    %9 = vector.shape_cast %6 : vector<8x64xbf16> to vector<1x8x64xbf16>
    tpu.vector_store %arg4[%c0_6, %c0_7, %c0_8], %9 {strides = array<i32>} : memref<1x8x64xbf16, #tpu.memory_space<vmem>>, vector<1x8x64xbf16>,
    return
  }
  func.func @transform_0(%arg0: i32) -> (i32, i32, i32) {
    %c0_i32 = arith.constant 0 : i32
    %c0_i32_0 = arith.constant 0 : i32
    %c0_i32_1 = arith.constant 0 : i32
    return %arg0, %c0_i32, %c0_i32_0 : i32, i32, i32
  }
  func.func @transform_1(%arg0: i32) -> (i32, i32) {
    %c0_i32 = arith.constant 0 : i32
    %c0_i32_0 = arith.constant 0 : i32
    %c0_i32_1 = arith.constant 0 : i32
    return %c0_i32, %c0_i32_0 : i32, i32
  }
  func.func @transform_2(%arg0: i32) -> (i32, i32) {
    %c0_i32 = arith.constant 0 : i32
    %c0_i32_0 = arith.constant 0 : i32
    %c0_i32_1 = arith.constant 0 : i32
    return %c0_i32, %c0_i32_0 : i32, i32
  }
  func.func @transform_3(%arg0: i32) -> (i32, i32, i32) {
    %c0_i32 = arith.constant 0 : i32
    %c0_i32_0 = arith.constant 0 : i32
    %c0_i32_1 = arith.constant 0 : i32
    return %arg0, %c0_i32, %c0_i32_0 : i32, i32, i32
  }
}

module attributes {stable_mosaic.version = 11 : i64} {
  func.func @_head_kernel(%arg0: i32, %arg1: memref<2x8x64xbf16, #tpu.memory_space<vmem>>, %arg2: memref<1x64xf32, #tpu.memory_space<vmem>>, %arg3: memref<1x64xf32, #tpu.memory_space<vmem>>, %arg4: memref<64x32xbf16, #tpu.memory_space<vmem>>, %arg5: memref<2x32xf32, #tpu.memory_space<vmem>>) attributes {dimension_semantics = [#tpu.dimension_semantics<arbitrary>], iteration_bounds = array<i64: 1>, scalar_prefetch = 0 : i64, scratch_operands = 0 : i64, tpu.core_type = #tpu.core_type<tc>, window_params = [{pipeline_mode = #tpu.pipeline_mode<synchronous>, transform_indices = @transform_0, window_bounds = array<i64: 2, 8, 64>}, {pipeline_mode = #tpu.pipeline_mode<synchronous>, transform_indices = @transform_1, window_bounds = array<i64: 1, 64>}, {pipeline_mode = #tpu.pipeline_mode<synchronous>, transform_indices = @transform_2, window_bounds = array<i64: 1, 64>}, {pipeline_mode = #tpu.pipeline_mode<synchronous>, transform_indices = @transform_3, window_bounds = array<i64: 64, 32>}, {pipeline_mode = #tpu.pipeline_mode<synchronous>, transform_indices = @transform_4, window_bounds = array<i64: 2, 32>}]} {
    %c0 = arith.constant 0 : index
    %c0_0 = arith.constant 0 : index
    %c0_1 = arith.constant 0 : index
    %0 = vector.load %arg1[%c0, %c0_0, %c0_1] : memref<2x8x64xbf16, #tpu.memory_space<vmem>>, vector<2x8x64xbf16>
    %1 = arith.extf %0 : vector<2x8x64xbf16> to vector<2x8x64xf32>
    %2 = vector.extract_strided_slice %1 {offsets = [0, 0, 0], sizes = [2, 1, 64], strides = [1, 1, 1]} : vector<2x8x64xf32> to vector<2x1x64xf32>
    %3 = vector.shape_cast %2 : vector<2x1x64xf32> to vector<2x64xf32>
    %c0_2 = arith.constant 0 : index
    %c0_3 = arith.constant 0 : index
    %4 = vector.load %arg2[%c0_2, %c0_3] : memref<1x64xf32, #tpu.memory_space<vmem>>, vector<1x64xf32>
    %c0_4 = arith.constant 0 : index
    %c0_5 = arith.constant 0 : index
    %5 = vector.load %arg3[%c0_4, %c0_5] : memref<1x64xf32, #tpu.memory_space<vmem>>, vector<1x64xf32>
    %cst = arith.constant dense<0.000000e+00> : vector<2xf32>
    %6 = vector.multi_reduction <add>, %3, %cst [1] : vector<2x64xf32> to vector<2xf32>
    %7 = vector.shape_cast %6 : vector<2xf32> to vector<2x1xf32>
    %cst_6 = arith.constant 6.400000e+01 : f32
    %8 = vector.broadcast %cst_6 : f32 to vector<2x1xf32>
    %9 = arith.divf %7, %8 : vector<2x1xf32>
    %10 = vector.broadcast %9 : vector<2x1xf32> to vector<2x64xf32>
    %11 = arith.subf %3, %10 : vector<2x64xf32>
    %12 = arith.mulf %11, %11 : vector<2x64xf32>
    %cst_7 = arith.constant dense<0.000000e+00> : vector<2xf32>
    %13 = vector.multi_reduction <add>, %12, %cst_7 [1] : vector<2x64xf32> to vector<2xf32>
    %14 = vector.shape_cast %13 : vector<2xf32> to vector<2x1xf32>
    %cst_8 = arith.constant 6.400000e+01 : f32
    %15 = vector.broadcast %cst_8 : f32 to vector<2x1xf32>
    %16 = arith.divf %14, %15 : vector<2x1xf32>
    %17 = vector.broadcast %9 : vector<2x1xf32> to vector<2x64xf32>
    %18 = arith.subf %3, %17 : vector<2x64xf32>
    %cst_9 = arith.constant 9.99999997E-7 : f32
    %19 = vector.broadcast %cst_9 : f32 to vector<2x1xf32>
    %20 = arith.addf %16, %19 : vector<2x1xf32>
    %21 = math.rsqrt %20 : vector<2x1xf32>
    %22 = vector.broadcast %21 : vector<2x1xf32> to vector<2x64xf32>
    %23 = arith.mulf %18, %22 : vector<2x64xf32>
    %24 = vector.broadcast %4 : vector<1x64xf32> to vector<2x64xf32>
    %25 = arith.mulf %23, %24 : vector<2x64xf32>
    %26 = vector.broadcast %5 : vector<1x64xf32> to vector<2x64xf32>
    %27 = arith.addf %25, %26 : vector<2x64xf32>
    %28 = arith.truncf %27 : vector<2x64xf32> to vector<2x64xbf16>
    %c0_10 = arith.constant 0 : index
    %c0_11 = arith.constant 0 : index
    %29 = vector.load %arg4[%c0_10, %c0_11] : memref<64x32xbf16, #tpu.memory_space<vmem>>, vector<64x32xbf16>
    %cst_12 = arith.constant dense<0.000000e+00> : vector<2x32xf32>
    %30 = tpu.matmul %28, %29, %cst_12 {dimension_numbers = #tpu.dot_dimension_numbers<[1], [0], [0], [1], [0, 0, 1, 1], [], []>} : vector<2x64xbf16>, vector<64x32xbf16>, vector<2x32xf32> -> vector<2x32xf32>
    %31 = arith.mulf %30, %30 : vector<2x32xf32>
    %cst_13 = arith.constant dense<0.000000e+00> : vector<2xf32>
    %32 = vector.multi_reduction <add>, %31, %cst_13 [1] : vector<2x32xf32> to vector<2xf32>
    %33 = vector.shape_cast %32 : vector<2xf32> to vector<2x1xf32>
    %cst_14 = arith.constant 9.99999996E-13 : f32
    %34 = vector.broadcast %cst_14 : f32 to vector<2x1xf32>
    %35 = arith.addf %33, %34 : vector<2x1xf32>
    %36 = math.rsqrt %35 : vector<2x1xf32>
    %37 = vector.broadcast %36 : vector<2x1xf32> to vector<2x32xf32>
    %38 = arith.mulf %30, %37 : vector<2x32xf32>
    %c0_15 = arith.constant 0 : index
    %c0_16 = arith.constant 0 : index
    %39 = vector.load %arg5[%c0_15, %c0_16] : memref<2x32xf32, #tpu.memory_space<vmem>>, vector<2x32xf32>
    tpu.vector_store %arg5[%c0_15, %c0_16], %38 {strides = array<i32>} : memref<2x32xf32, #tpu.memory_space<vmem>>, vector<2x32xf32>,
    return
  }
  func.func @transform_0(%arg0: i32) -> (i32, i32, i32) {
    %c0_i32 = arith.constant 0 : i32
    %c0_i32_0 = arith.constant 0 : i32
    %c0_i32_1 = arith.constant 0 : i32
    %c0_i32_2 = arith.constant 0 : i32
    return %c0_i32, %c0_i32_0, %c0_i32_1 : i32, i32, i32
  }
  func.func @transform_1(%arg0: i32) -> (i32, i32) {
    %c0_i32 = arith.constant 0 : i32
    %c0_i32_0 = arith.constant 0 : i32
    %c0_i32_1 = arith.constant 0 : i32
    return %c0_i32, %c0_i32_0 : i32, i32
  }
  func.func @transform_2(%arg0: i32) -> (i32, i32) {
    %c0_i32 = arith.constant 0 : i32
    %c0_i32_0 = arith.constant 0 : i32
    %c0_i32_1 = arith.constant 0 : i32
    return %c0_i32, %c0_i32_0 : i32, i32
  }
  func.func @transform_3(%arg0: i32) -> (i32, i32) {
    %c0_i32 = arith.constant 0 : i32
    %c0_i32_0 = arith.constant 0 : i32
    %c0_i32_1 = arith.constant 0 : i32
    return %c0_i32, %c0_i32_0 : i32, i32
  }
  func.func @transform_4(%arg0: i32) -> (i32, i32) {
    %c0_i32 = arith.constant 0 : i32
    %c0_i32_0 = arith.constant 0 : i32
    %c0_i32_1 = arith.constant 0 : i32
    return %c0_i32, %c0_i32_0 : i32, i32
  }
}

module attributes {stable_mosaic.version = 11 : i64} {
  func.func @_block_kernel(%arg0: i32, %arg1: memref<1x8x64xbf16, #tpu.memory_space<vmem>>, %arg2: memref<1x64xf32, #tpu.memory_space<vmem>>, %arg3: memref<1x64xf32, #tpu.memory_space<vmem>>, %arg4: memref<64x192xbf16, #tpu.memory_space<vmem>>, %arg5: memref<1x192xf32, #tpu.memory_space<vmem>>, %arg6: memref<64x64xbf16, #tpu.memory_space<vmem>>, %arg7: memref<1x64xf32, #tpu.memory_space<vmem>>, %arg8: memref<1x64xf32, #tpu.memory_space<vmem>>, %arg9: memref<1x64xf32, #tpu.memory_space<vmem>>, %arg10: memref<64x256xbf16, #tpu.memory_space<vmem>>, %arg11: memref<1x256xf32, #tpu.memory_space<vmem>>, %arg12: memref<256x64xbf16, #tpu.memory_space<vmem>>, %arg13: memref<1x64xf32, #tpu.memory_space<vmem>>, %arg14: memref<1x8x64xbf16, #tpu.memory_space<vmem>>) attributes {dimension_semantics = [#tpu.dimension_semantics<parallel>], iteration_bounds = array<i64: 2>, scalar_prefetch = 0 : i64, scratch_operands = 0 : i64, tpu.core_type = #tpu.core_type<tc>, window_params = [{transform_indices = @transform_0, window_bounds = array<i64: 1, 8, 64>}, {pipeline_mode = #tpu.pipeline_mode<synchronous>, transform_indices = @transform_1, window_bounds = array<i64: 1, 64>}, {pipeline_mode = #tpu.pipeline_mode<synchronous>, transform_indices = @transform_2, window_bounds = array<i64: 1, 64>}, {pipeline_mode = #tpu.pipeline_mode<synchronous>, transform_indices = @transform_3, window_bounds = array<i64: 64, 192>}, {pipeline_mode = #tpu.pipeline_mode<synchronous>, transform_indices = @transform_4, window_bounds = array<i64: 1, 192>}, {pipeline_mode = #tpu.pipeline_mode<synchronous>, transform_indices = @transform_5, window_bounds = array<i64: 64, 64>}, {pipeline_mode = #tpu.pipeline_mode<synchronous>, transform_indices = @transform_6, window_bounds = array<i64: 1, 64>}, {pipeline_mode = #tpu.pipeline_mode<synchronous>, transform_indices = @transform_7, window_bounds = array<i64: 1, 64>}, {pipeline_mode = #tpu.pipeline_mode<synchronous>, transform_indices = @transform_8, window_bounds = array<i64: 1, 64>}, {pipeline_mode = #tpu.pipeline_mode<synchronous>, transform_indices = @transform_9, window_bounds = array<i64: 64, 256>}, {pipeline_mode = #tpu.pipeline_mode<synchronous>, transform_indices = @transform_10, window_bounds = array<i64: 1, 256>}, {pipeline_mode = #tpu.pipeline_mode<synchronous>, transform_indices = @transform_11, window_bounds = array<i64: 256, 64>}, {pipeline_mode = #tpu.pipeline_mode<synchronous>, transform_indices = @transform_12, window_bounds = array<i64: 1, 64>}, {transform_indices = @transform_13, window_bounds = array<i64: 1, 8, 64>}]} {
    %c0 = arith.constant 0 : index
    %c0_0 = arith.constant 0 : index
    %c0_1 = arith.constant 0 : index
    %0 = vector.load %arg1[%c0, %c0_0, %c0_1] : memref<1x8x64xbf16, #tpu.memory_space<vmem>>, vector<1x8x64xbf16>
    %1 = vector.shape_cast %0 : vector<1x8x64xbf16> to vector<8x64xbf16>
    %2 = arith.extf %1 : vector<8x64xbf16> to vector<8x64xf32>
    %c0_2 = arith.constant 0 : index
    %c0_3 = arith.constant 0 : index
    %3 = vector.load %arg2[%c0_2, %c0_3] : memref<1x64xf32, #tpu.memory_space<vmem>>, vector<1x64xf32>
    %c0_4 = arith.constant 0 : index
    %c0_5 = arith.constant 0 : index
    %4 = vector.load %arg3[%c0_4, %c0_5] : memref<1x64xf32, #tpu.memory_space<vmem>>, vector<1x64xf32>
    %cst = arith.constant dense<0.000000e+00> : vector<8xf32>
    %5 = vector.multi_reduction <add>, %2, %cst [1] : vector<8x64xf32> to vector<8xf32>
    %6 = vector.shape_cast %5 : vector<8xf32> to vector<8x1xf32>
    %cst_6 = arith.constant 6.400000e+01 : f32
    %7 = vector.broadcast %cst_6 : f32 to vector<8x1xf32>
    %8 = arith.divf %6, %7 : vector<8x1xf32>
    %9 = vector.broadcast %8 : vector<8x1xf32> to vector<8x64xf32>
    %10 = arith.subf %2, %9 : vector<8x64xf32>
    %11 = arith.mulf %10, %10 : vector<8x64xf32>
    %cst_7 = arith.constant dense<0.000000e+00> : vector<8xf32>
    %12 = vector.multi_reduction <add>, %11, %cst_7 [1] : vector<8x64xf32> to vector<8xf32>
    %13 = vector.shape_cast %12 : vector<8xf32> to vector<8x1xf32>
    %cst_8 = arith.constant 6.400000e+01 : f32
    %14 = vector.broadcast %cst_8 : f32 to vector<8x1xf32>
    %15 = arith.divf %13, %14 : vector<8x1xf32>
    %16 = vector.broadcast %8 : vector<8x1xf32> to vector<8x64xf32>
    %17 = arith.subf %2, %16 : vector<8x64xf32>
    %cst_9 = arith.constant 9.99999997E-7 : f32
    %18 = vector.broadcast %cst_9 : f32 to vector<8x1xf32>
    %19 = arith.addf %15, %18 : vector<8x1xf32>
    %20 = math.rsqrt %19 : vector<8x1xf32>
    %21 = vector.broadcast %20 : vector<8x1xf32> to vector<8x64xf32>
    %22 = arith.mulf %17, %21 : vector<8x64xf32>
    %23 = vector.broadcast %3 : vector<1x64xf32> to vector<8x64xf32>
    %24 = arith.mulf %22, %23 : vector<8x64xf32>
    %25 = vector.broadcast %4 : vector<1x64xf32> to vector<8x64xf32>
    %26 = arith.addf %24, %25 : vector<8x64xf32>
    %27 = arith.truncf %26 : vector<8x64xf32> to vector<8x64xbf16>
    %c0_10 = arith.constant 0 : index
    %c0_11 = arith.constant 0 : index
    %28 = vector.load %arg4[%c0_10, %c0_11] : memref<64x192xbf16, #tpu.memory_space<vmem>>, vector<64x192xbf16>
    %cst_12 = arith.constant dense<0.000000e+00> : vector<8x192xf32>
    %29 = tpu.matmul %27, %28, %cst_12 {dimension_numbers = #tpu.dot_dimension_numbers<[1], [0], [0], [1], [0, 0, 1, 1], [], []>} : vector<8x64xbf16>, vector<64x192xbf16>, vector<8x192xf32> -> vector<8x192xf32>
    %c0_13 = arith.constant 0 : index
    %c0_14 = arith.constant 0 : index
    %30 = vector.load %arg5[%c0_13, %c0_14] : memref<1x192xf32, #tpu.memory_space<vmem>>, vector<1x192xf32>
    %31 = vector.broadcast %30 : vector<1x192xf32> to vector<8x192xf32>
    %32 = arith.addf %29, %31 : vector<8x192xf32>
    %33 = vector.extract_strided_slice %32 {offsets = [0, 0], sizes = [8, 64], strides = [1, 1]} : vector<8x192xf32> to vector<8x64xf32>
    %34 = vector.extract_strided_slice %32 {offsets = [0, 64], sizes = [8, 64], strides = [1, 1]} : vector<8x192xf32> to vector<8x64xf32>
    %35 = vector.extract_strided_slice %32 {offsets = [0, 128], sizes = [8, 64], strides = [1, 1]} : vector<8x192xf32> to vector<8x64xf32>
    %36 = tpu.iota {dimensions = array<i32: 1>} : vector<8x8xi32>
    %c5_i32 = arith.constant 5 : i32
    %37 = vector.broadcast %c5_i32 : i32 to vector<8x8xi32>
    %38 = arith.cmpi slt, %36, %37 : vector<8x8xi32>
    %39 = vector.extract_strided_slice %33 {offsets = [0, 0], sizes = [8, 16], strides = [1, 1]} : vector<8x64xf32> to vector<8x16xf32>
    %40 = arith.truncf %39 : vector<8x16xf32> to vector<8x16xbf16>
    %41 = vector.extract_strided_slice %34 {offsets = [0, 0], sizes = [8, 16], strides = [1, 1]} : vector<8x64xf32> to vector<8x16xf32>
    %42 = arith.truncf %41 : vector<8x16xf32> to vector<8x16xbf16>
    %43 = vector.extract_strided_slice %35 {offsets = [0, 0], sizes = [8, 16], strides = [1, 1]} : vector<8x64xf32> to vector<8x16xf32>
    %44 = arith.truncf %43 : vector<8x16xf32> to vector<8x16xbf16>
    %cst_15 = arith.constant dense<0.000000e+00> : vector<8x8xf32>
    %45 = tpu.matmul %40, %42, %cst_15 {dimension_numbers = #tpu.dot_dimension_numbers<[1], [1], [0], [0], [0, 0, 1, 0], [], []>} : vector<8x16xbf16>, vector<8x16xbf16>, vector<8x8xf32> -> vector<8x8xf32>
    %cst_16 = arith.constant 2.500000e-01 : f32
    %46 = vector.broadcast %cst_16 : f32 to vector<8x8xf32>
    %47 = arith.mulf %45, %46 : vector<8x8xf32>
    %cst_17 = arith.constant -1.000000e+30 : f32
    %48 = vector.broadcast %cst_17 : f32 to vector<8x8xf32>
    %49 = arith.select %38, %47, %48 : vector<8x8xi1>, vector<8x8xf32>
    %cst_18 = arith.constant dense<0xFF800000> : vector<8xf32>
    %50 = vector.multi_reduction <maximumf>, %49, %cst_18 [1] : vector<8x8xf32> to vector<8xf32>
    %51 = vector.shape_cast %50 : vector<8xf32> to vector<8x1xf32>
    %52 = vector.broadcast %51 : vector<8x1xf32> to vector<8x8xf32>
    %53 = arith.subf %49, %52 : vector<8x8xf32>
    %54 = math.exp %53 : vector<8x8xf32>
    %cst_19 = arith.constant dense<0.000000e+00> : vector<8xf32>
    %55 = vector.multi_reduction <add>, %54, %cst_19 [1] : vector<8x8xf32> to vector<8xf32>
    %56 = vector.shape_cast %55 : vector<8xf32> to vector<8x1xf32>
    %57 = tpu.reciprocal %56 {approx = true} : vector<8x1xf32> -> vector<8x1xf32>
    %58 = vector.broadcast %57 : vector<8x1xf32> to vector<8x8xf32>
    %59 = arith.mulf %54, %58 : vector<8x8xf32>
    %60 = arith.truncf %59 : vector<8x8xf32> to vector<8x8xbf16>
    %cst_20 = arith.constant dense<0.000000e+00> : vector<8x16xf32>
    %61 = tpu.matmul %60, %44, %cst_20 {dimension_numbers = #tpu.dot_dimension_numbers<[1], [0], [0], [1], [0, 0, 1, 1], [], []>} : vector<8x8xbf16>, vector<8x16xbf16>, vector<8x16xf32> -> vector<8x16xf32>
    %62 = vector.extract_strided_slice %33 {offsets = [0, 16], sizes = [8, 16], strides = [1, 1]} : vector<8x64xf32> to vector<8x16xf32>
    %63 = arith.truncf %62 : vector<8x16xf32> to vector<8x16xbf16>
    %64 = vector.extract_strided_slice %34 {offsets = [0, 16], sizes = [8, 16], strides = [1, 1]} : vector<8x64xf32> to vector<8x16xf32>
    %65 = arith.truncf %64 : vector<8x16xf32> to vector<8x16xbf16>
    %66 = vector.extract_strided_slice %35 {offsets = [0, 16], sizes = [8, 16], strides = [1, 1]} : vector<8x64xf32> to vector<8x16xf32>
    %67 = arith.truncf %66 : vector<8x16xf32> to vector<8x16xbf16>
    %cst_21 = arith.constant dense<0.000000e+00> : vector<8x8xf32>
    %68 = tpu.matmul %63, %65, %cst_21 {dimension_numbers = #tpu.dot_dimension_numbers<[1], [1], [0], [0], [0, 0, 1, 0], [], []>} : vector<8x16xbf16>, vector<8x16xbf16>, vector<8x8xf32> -> vector<8x8xf32>
    %cst_22 = arith.constant 2.500000e-01 : f32
    %69 = vector.broadcast %cst_22 : f32 to vector<8x8xf32>
    %70 = arith.mulf %68, %69 : vector<8x8xf32>
    %cst_23 = arith.constant -1.000000e+30 : f32
    %71 = vector.broadcast %cst_23 : f32 to vector<8x8xf32>
    %72 = arith.select %38, %70, %71 : vector<8x8xi1>, vector<8x8xf32>
    %cst_24 = arith.constant dense<0xFF800000> : vector<8xf32>
    %73 = vector.multi_reduction <maximumf>, %72, %cst_24 [1] : vector<8x8xf32> to vector<8xf32>
    %74 = vector.shape_cast %73 : vector<8xf32> to vector<8x1xf32>
    %75 = vector.broadcast %74 : vector<8x1xf32> to vector<8x8xf32>
    %76 = arith.subf %72, %75 : vector<8x8xf32>
    %77 = math.exp %76 : vector<8x8xf32>
    %cst_25 = arith.constant dense<0.000000e+00> : vector<8xf32>
    %78 = vector.multi_reduction <add>, %77, %cst_25 [1] : vector<8x8xf32> to vector<8xf32>
    %79 = vector.shape_cast %78 : vector<8xf32> to vector<8x1xf32>
    %80 = tpu.reciprocal %79 {approx = true} : vector<8x1xf32> -> vector<8x1xf32>
    %81 = vector.broadcast %80 : vector<8x1xf32> to vector<8x8xf32>
    %82 = arith.mulf %77, %81 : vector<8x8xf32>
    %83 = arith.truncf %82 : vector<8x8xf32> to vector<8x8xbf16>
    %cst_26 = arith.constant dense<0.000000e+00> : vector<8x16xf32>
    %84 = tpu.matmul %83, %67, %cst_26 {dimension_numbers = #tpu.dot_dimension_numbers<[1], [0], [0], [1], [0, 0, 1, 1], [], []>} : vector<8x8xbf16>, vector<8x16xbf16>, vector<8x16xf32> -> vector<8x16xf32>
    %85 = vector.extract_strided_slice %33 {offsets = [0, 32], sizes = [8, 16], strides = [1, 1]} : vector<8x64xf32> to vector<8x16xf32>
    %86 = arith.truncf %85 : vector<8x16xf32> to vector<8x16xbf16>
    %87 = vector.extract_strided_slice %34 {offsets = [0, 32], sizes = [8, 16], strides = [1, 1]} : vector<8x64xf32> to vector<8x16xf32>
    %88 = arith.truncf %87 : vector<8x16xf32> to vector<8x16xbf16>
    %89 = vector.extract_strided_slice %35 {offsets = [0, 32], sizes = [8, 16], strides = [1, 1]} : vector<8x64xf32> to vector<8x16xf32>
    %90 = arith.truncf %89 : vector<8x16xf32> to vector<8x16xbf16>
    %cst_27 = arith.constant dense<0.000000e+00> : vector<8x8xf32>
    %91 = tpu.matmul %86, %88, %cst_27 {dimension_numbers = #tpu.dot_dimension_numbers<[1], [1], [0], [0], [0, 0, 1, 0], [], []>} : vector<8x16xbf16>, vector<8x16xbf16>, vector<8x8xf32> -> vector<8x8xf32>
    %cst_28 = arith.constant 2.500000e-01 : f32
    %92 = vector.broadcast %cst_28 : f32 to vector<8x8xf32>
    %93 = arith.mulf %91, %92 : vector<8x8xf32>
    %cst_29 = arith.constant -1.000000e+30 : f32
    %94 = vector.broadcast %cst_29 : f32 to vector<8x8xf32>
    %95 = arith.select %38, %93, %94 : vector<8x8xi1>, vector<8x8xf32>
    %cst_30 = arith.constant dense<0xFF800000> : vector<8xf32>
    %96 = vector.multi_reduction <maximumf>, %95, %cst_30 [1] : vector<8x8xf32> to vector<8xf32>
    %97 = vector.shape_cast %96 : vector<8xf32> to vector<8x1xf32>
    %98 = vector.broadcast %97 : vector<8x1xf32> to vector<8x8xf32>
    %99 = arith.subf %95, %98 : vector<8x8xf32>
    %100 = math.exp %99 : vector<8x8xf32>
    %cst_31 = arith.constant dense<0.000000e+00> : vector<8xf32>
    %101 = vector.multi_reduction <add>, %100, %cst_31 [1] : vector<8x8xf32> to vector<8xf32>
    %102 = vector.shape_cast %101 : vector<8xf32> to vector<8x1xf32>
    %103 = tpu.reciprocal %102 {approx = true} : vector<8x1xf32> -> vector<8x1xf32>
    %104 = vector.broadcast %103 : vector<8x1xf32> to vector<8x8xf32>
    %105 = arith.mulf %100, %104 : vector<8x8xf32>
    %106 = arith.truncf %105 : vector<8x8xf32> to vector<8x8xbf16>
    %cst_32 = arith.constant dense<0.000000e+00> : vector<8x16xf32>
    %107 = tpu.matmul %106, %90, %cst_32 {dimension_numbers = #tpu.dot_dimension_numbers<[1], [0], [0], [1], [0, 0, 1, 1], [], []>} : vector<8x8xbf16>, vector<8x16xbf16>, vector<8x16xf32> -> vector<8x16xf32>
    %108 = vector.extract_strided_slice %33 {offsets = [0, 48], sizes = [8, 16], strides = [1, 1]} : vector<8x64xf32> to vector<8x16xf32>
    %109 = arith.truncf %108 : vector<8x16xf32> to vector<8x16xbf16>
    %110 = vector.extract_strided_slice %34 {offsets = [0, 48], sizes = [8, 16], strides = [1, 1]} : vector<8x64xf32> to vector<8x16xf32>
    %111 = arith.truncf %110 : vector<8x16xf32> to vector<8x16xbf16>
    %112 = vector.extract_strided_slice %35 {offsets = [0, 48], sizes = [8, 16], strides = [1, 1]} : vector<8x64xf32> to vector<8x16xf32>
    %113 = arith.truncf %112 : vector<8x16xf32> to vector<8x16xbf16>
    %cst_33 = arith.constant dense<0.000000e+00> : vector<8x8xf32>
    %114 = tpu.matmul %109, %111, %cst_33 {dimension_numbers = #tpu.dot_dimension_numbers<[1], [1], [0], [0], [0, 0, 1, 0], [], []>} : vector<8x16xbf16>, vector<8x16xbf16>, vector<8x8xf32> -> vector<8x8xf32>
    %cst_34 = arith.constant 2.500000e-01 : f32
    %115 = vector.broadcast %cst_34 : f32 to vector<8x8xf32>
    %116 = arith.mulf %114, %115 : vector<8x8xf32>
    %cst_35 = arith.constant -1.000000e+30 : f32
    %117 = vector.broadcast %cst_35 : f32 to vector<8x8xf32>
    %118 = arith.select %38, %116, %117 : vector<8x8xi1>, vector<8x8xf32>
    %cst_36 = arith.constant dense<0xFF800000> : vector<8xf32>
    %119 = vector.multi_reduction <maximumf>, %118, %cst_36 [1] : vector<8x8xf32> to vector<8xf32>
    %120 = vector.shape_cast %119 : vector<8xf32> to vector<8x1xf32>
    %121 = vector.broadcast %120 : vector<8x1xf32> to vector<8x8xf32>
    %122 = arith.subf %118, %121 : vector<8x8xf32>
    %123 = math.exp %122 : vector<8x8xf32>
    %cst_37 = arith.constant dense<0.000000e+00> : vector<8xf32>
    %124 = vector.multi_reduction <add>, %123, %cst_37 [1] : vector<8x8xf32> to vector<8xf32>
    %125 = vector.shape_cast %124 : vector<8xf32> to vector<8x1xf32>
    %126 = tpu.reciprocal %125 {approx = true} : vector<8x1xf32> -> vector<8x1xf32>
    %127 = vector.broadcast %126 : vector<8x1xf32> to vector<8x8xf32>
    %128 = arith.mulf %123, %127 : vector<8x8xf32>
    %129 = arith.truncf %128 : vector<8x8xf32> to vector<8x8xbf16>
    %cst_38 = arith.constant dense<0.000000e+00> : vector<8x16xf32>
    %130 = tpu.matmul %129, %113, %cst_38 {dimension_numbers = #tpu.dot_dimension_numbers<[1], [0], [0], [1], [0, 0, 1, 1], [], []>} : vector<8x8xbf16>, vector<8x16xbf16>, vector<8x16xf32> -> vector<8x16xf32>
    %131 = tpu.concatenate %61, %84, %107, %130 in 1 : vector<8x16xf32>, vector<8x16xf32>, vector<8x16xf32>, vector<8x16xf32> -> vector<8x64xf32>
    %132 = arith.truncf %131 : vector<8x64xf32> to vector<8x64xbf16>
    %c0_39 = arith.constant 0 : index
    %c0_40 = arith.constant 0 : index
    %133 = vector.load %arg6[%c0_39, %c0_40] : memref<64x64xbf16, #tpu.memory_space<vmem>>, vector<64x64xbf16>
    %cst_41 = arith.constant dense<0.000000e+00> : vector<8x64xf32>
    %134 = tpu.matmul %132, %133, %cst_41 {dimension_numbers = #tpu.dot_dimension_numbers<[1], [0], [0], [1], [0, 0, 1, 1], [], []>} : vector<8x64xbf16>, vector<64x64xbf16>, vector<8x64xf32> -> vector<8x64xf32>
    %c0_42 = arith.constant 0 : index
    %c0_43 = arith.constant 0 : index
    %135 = vector.load %arg7[%c0_42, %c0_43] : memref<1x64xf32, #tpu.memory_space<vmem>>, vector<1x64xf32>
    %136 = vector.broadcast %135 : vector<1x64xf32> to vector<8x64xf32>
    %137 = arith.addf %134, %136 : vector<8x64xf32>
    %138 = arith.addf %2, %137 : vector<8x64xf32>
    %c0_44 = arith.constant 0 : index
    %c0_45 = arith.constant 0 : index
    %139 = vector.load %arg8[%c0_44, %c0_45] : memref<1x64xf32, #tpu.memory_space<vmem>>, vector<1x64xf32>
    %c0_46 = arith.constant 0 : index
    %c0_47 = arith.constant 0 : index
    %140 = vector.load %arg9[%c0_46, %c0_47] : memref<1x64xf32, #tpu.memory_space<vmem>>, vector<1x64xf32>
    %cst_48 = arith.constant dense<0.000000e+00> : vector<8xf32>
    %141 = vector.multi_reduction <add>, %138, %cst_48 [1] : vector<8x64xf32> to vector<8xf32>
    %142 = vector.shape_cast %141 : vector<8xf32> to vector<8x1xf32>
    %cst_49 = arith.constant 6.400000e+01 : f32
    %143 = vector.broadcast %cst_49 : f32 to vector<8x1xf32>
    %144 = arith.divf %142, %143 : vector<8x1xf32>
    %145 = vector.broadcast %144 : vector<8x1xf32> to vector<8x64xf32>
    %146 = arith.subf %138, %145 : vector<8x64xf32>
    %147 = arith.mulf %146, %146 : vector<8x64xf32>
    %cst_50 = arith.constant dense<0.000000e+00> : vector<8xf32>
    %148 = vector.multi_reduction <add>, %147, %cst_50 [1] : vector<8x64xf32> to vector<8xf32>
    %149 = vector.shape_cast %148 : vector<8xf32> to vector<8x1xf32>
    %cst_51 = arith.constant 6.400000e+01 : f32
    %150 = vector.broadcast %cst_51 : f32 to vector<8x1xf32>
    %151 = arith.divf %149, %150 : vector<8x1xf32>
    %152 = vector.broadcast %144 : vector<8x1xf32> to vector<8x64xf32>
    %153 = arith.subf %138, %152 : vector<8x64xf32>
    %cst_52 = arith.constant 9.99999997E-7 : f32
    %154 = vector.broadcast %cst_52 : f32 to vector<8x1xf32>
    %155 = arith.addf %151, %154 : vector<8x1xf32>
    %156 = math.rsqrt %155 : vector<8x1xf32>
    %157 = vector.broadcast %156 : vector<8x1xf32> to vector<8x64xf32>
    %158 = arith.mulf %153, %157 : vector<8x64xf32>
    %159 = vector.broadcast %139 : vector<1x64xf32> to vector<8x64xf32>
    %160 = arith.mulf %158, %159 : vector<8x64xf32>
    %161 = vector.broadcast %140 : vector<1x64xf32> to vector<8x64xf32>
    %162 = arith.addf %160, %161 : vector<8x64xf32>
    %163 = arith.truncf %162 : vector<8x64xf32> to vector<8x64xbf16>
    %c0_53 = arith.constant 0 : index
    %c0_54 = arith.constant 0 : index
    %164 = vector.load %arg10[%c0_53, %c0_54] : memref<64x256xbf16, #tpu.memory_space<vmem>>, vector<64x256xbf16>
    %cst_55 = arith.constant dense<0.000000e+00> : vector<8x256xf32>
    %165 = tpu.matmul %163, %164, %cst_55 {dimension_numbers = #tpu.dot_dimension_numbers<[1], [0], [0], [1], [0, 0, 1, 1], [], []>} : vector<8x64xbf16>, vector<64x256xbf16>, vector<8x256xf32> -> vector<8x256xf32>
    %c0_56 = arith.constant 0 : index
    %c0_57 = arith.constant 0 : index
    %166 = vector.load %arg11[%c0_56, %c0_57] : memref<1x256xf32, #tpu.memory_space<vmem>>, vector<1x256xf32>
    %167 = vector.broadcast %166 : vector<1x256xf32> to vector<8x256xf32>
    %168 = arith.addf %165, %167 : vector<8x256xf32>
    %cst_58 = arith.constant 5.000000e-01 : f32
    %169 = vector.broadcast %cst_58 : f32 to vector<8x256xf32>
    %170 = arith.mulf %169, %168 : vector<8x256xf32>
    %cst_59 = arith.constant 0.707106769 : f32
    %171 = vector.broadcast %cst_59 : f32 to vector<8x256xf32>
    %172 = arith.mulf %168, %171 : vector<8x256xf32>
    %173 = math.erf %172 : vector<8x256xf32>
    %cst_60 = arith.constant 1.000000e+00 : f32
    %174 = vector.broadcast %cst_60 : f32 to vector<8x256xf32>
    %175 = arith.addf %174, %173 : vector<8x256xf32>
    %176 = arith.mulf %170, %175 : vector<8x256xf32>
    %177 = arith.truncf %176 : vector<8x256xf32> to vector<8x256xbf16>
    %c0_61 = arith.constant 0 : index
    %c0_62 = arith.constant 0 : index
    %178 = vector.load %arg12[%c0_61, %c0_62] : memref<256x64xbf16, #tpu.memory_space<vmem>>, vector<256x64xbf16>
    %cst_63 = arith.constant dense<0.000000e+00> : vector<8x64xf32>
    %179 = tpu.matmul %177, %178, %cst_63 {dimension_numbers = #tpu.dot_dimension_numbers<[1], [0], [0], [1], [0, 0, 1, 1], [], []>} : vector<8x256xbf16>, vector<256x64xbf16>, vector<8x64xf32> -> vector<8x64xf32>
    %c0_64 = arith.constant 0 : index
    %c0_65 = arith.constant 0 : index
    %180 = vector.load %arg13[%c0_64, %c0_65] : memref<1x64xf32, #tpu.memory_space<vmem>>, vector<1x64xf32>
    %181 = vector.broadcast %180 : vector<1x64xf32> to vector<8x64xf32>
    %182 = arith.addf %179, %181 : vector<8x64xf32>
    %183 = arith.addf %138, %182 : vector<8x64xf32>
    %184 = arith.truncf %183 : vector<8x64xf32> to vector<8x64xbf16>
    %c0_66 = arith.constant 0 : index
    %c0_67 = arith.constant 0 : index
    %c0_68 = arith.constant 0 : index
    %185 = vector.load %arg14[%c0_66, %c0_67, %c0_68] : memref<1x8x64xbf16, #tpu.memory_space<vmem>>, vector<1x8x64xbf16>
    %186 = vector.shape_cast %185 : vector<1x8x64xbf16> to vector<8x64xbf16>
    %187 = vector.shape_cast %184 : vector<8x64xbf16> to vector<1x8x64xbf16>
    tpu.vector_store %arg14[%c0_66, %c0_67, %c0_68], %187 {strides = array<i32>} : memref<1x8x64xbf16, #tpu.memory_space<vmem>>, vector<1x8x64xbf16>,
    return
  }
  func.func @transform_0(%arg0: i32) -> (i32, i32, i32) {
    %c0_i32 = arith.constant 0 : i32
    %c0_i32_0 = arith.constant 0 : i32
    %c0_i32_1 = arith.constant 0 : i32
    return %arg0, %c0_i32, %c0_i32_0 : i32, i32, i32
  }
  func.func @transform_1(%arg0: i32) -> (i32, i32) {
    %c0_i32 = arith.constant 0 : i32
    %c0_i32_0 = arith.constant 0 : i32
    %c0_i32_1 = arith.constant 0 : i32
    return %c0_i32, %c0_i32_0 : i32, i32
  }
  func.func @transform_2(%arg0: i32) -> (i32, i32) {
    %c0_i32 = arith.constant 0 : i32
    %c0_i32_0 = arith.constant 0 : i32
    %c0_i32_1 = arith.constant 0 : i32
    return %c0_i32, %c0_i32_0 : i32, i32
  }
  func.func @transform_3(%arg0: i32) -> (i32, i32) {
    %c0_i32 = arith.constant 0 : i32
    %c0_i32_0 = arith.constant 0 : i32
    %c0_i32_1 = arith.constant 0 : i32
    return %c0_i32, %c0_i32_0 : i32, i32
  }
  func.func @transform_4(%arg0: i32) -> (i32, i32) {
    %c0_i32 = arith.constant 0 : i32
    %c0_i32_0 = arith.constant 0 : i32
    %c0_i32_1 = arith.constant 0 : i32
    return %c0_i32, %c0_i32_0 : i32, i32
  }
  func.func @transform_5(%arg0: i32) -> (i32, i32) {
    %c0_i32 = arith.constant 0 : i32
    %c0_i32_0 = arith.constant 0 : i32
    %c0_i32_1 = arith.constant 0 : i32
    return %c0_i32, %c0_i32_0 : i32, i32
  }
  func.func @transform_6(%arg0: i32) -> (i32, i32) {
    %c0_i32 = arith.constant 0 : i32
    %c0_i32_0 = arith.constant 0 : i32
    %c0_i32_1 = arith.constant 0 : i32
    return %c0_i32, %c0_i32_0 : i32, i32
  }
  func.func @transform_7(%arg0: i32) -> (i32, i32) {
    %c0_i32 = arith.constant 0 : i32
    %c0_i32_0 = arith.constant 0 : i32
    %c0_i32_1 = arith.constant 0 : i32
    return %c0_i32, %c0_i32_0 : i32, i32
  }
  func.func @transform_8(%arg0: i32) -> (i32, i32) {
    %c0_i32 = arith.constant 0 : i32
    %c0_i32_0 = arith.constant 0 : i32
    %c0_i32_1 = arith.constant 0 : i32
    return %c0_i32, %c0_i32_0 : i32, i32
  }
  func.func @transform_9(%arg0: i32) -> (i32, i32) {
    %c0_i32 = arith.constant 0 : i32
    %c0_i32_0 = arith.constant 0 : i32
    %c0_i32_1 = arith.constant 0 : i32
    return %c0_i32, %c0_i32_0 : i32, i32
  }
  func.func @transform_10(%arg0: i32) -> (i32, i32) {
    %c0_i32 = arith.constant 0 : i32
    %c0_i32_0 = arith.constant 0 : i32
    %c0_i32_1 = arith.constant 0 : i32
    return %c0_i32, %c0_i32_0 : i32, i32
  }
  func.func @transform_11(%arg0: i32) -> (i32, i32) {
    %c0_i32 = arith.constant 0 : i32
    %c0_i32_0 = arith.constant 0 : i32
    %c0_i32_1 = arith.constant 0 : i32
    return %c0_i32, %c0_i32_0 : i32, i32
  }
  func.func @transform_12(%arg0: i32) -> (i32, i32) {
    %c0_i32 = arith.constant 0 : i32
    %c0_i32_0 = arith.constant 0 : i32
    %c0_i32_1 = arith.constant 0 : i32
    return %c0_i32, %c0_i32_0 : i32, i32
  }
  func.func @transform_13(%arg0: i32) -> (i32, i32, i32) {
    %c0_i32 = arith.constant 0 : i32
    %c0_i32_0 = arith.constant 0 : i32
    %c0_i32_1 = arith.constant 0 : i32
    return %arg0, %c0_i32, %c0_i32_0 : i32, i32, i32
  }
}

</mosaic_0001>

<llo_original>
// kernel: biomedclip_forward.7
$region0: #{biomedclip_forward.7}
  #allocation0 [shape = 'u32[]', space=smem, size = 0x4, offset = 0x4, fixed_abs, tag = 'smem constant byte address 0x4 - core index']
  #allocation1 [shape = 'u32[144,128]{1,0:T(1,128)}', space=vmem, size = 0x12000, scoped, tag = 'internal scratch']
  %s0 = inlined_call_operand.vmem [shape: bf16[2,8,64], index: 0, kind: input, shape index: {}]
  %s1 = inlined_call_operand.vmem [shape: f32[1,64], index: 1, kind: input, shape index: {}]
  %s2 = inlined_call_operand.vmem [shape: f32[1,64], index: 2, kind: input, shape index: {}]
  %s3 = inlined_call_operand.vmem [shape: bf16[64,32], index: 3, kind: input, shape index: {}]
  %s4 = inlined_call_operand.hbm [shape: f32[2,32], index: 4, kind: output, shape index: {}]
  %s5 = sld [smem:[#allocation0]]
  $region26: #{biomedclip_forward.7} parent=0
    _
  %s7 = ssub.s32 1, %s5
  %s8 = scalar_select 0, %s7, %s5
  $region1: #{biomedclip_forward.7} parent=0
    #allocation2 [shape = 'u8[1024]{0}', space=vmem, size = 0x400, scoped, tag = 'output window, operand 0, single buffered']
    #allocation3 [shape = 's32[1]{0}', space=sflag, size = 0x4, scoped, tag = 'scoped memory for biomedclip_forward.7']
    %9 = vsyncpa [#allocation3], 0
    // Predicated region
    $region2: #{biomedclip_forward.7} parent=1 // pred_check
      _
    $region3: #{biomedclip_forward.7} parent=1 // pred_check_branch
      %11 = sbr.rel (0) target = $region5
    $region4: #{biomedclip_forward.7} parent=1 // pred_region
      _
    $region5: #{biomedclip_forward.7} parent=1 // pred_fallthru
      _
    // Predicated region
    $region6: #{biomedclip_forward.7} parent=1 // pred_check
      _
    $region7: #{biomedclip_forward.7} parent=1 // pred_check_branch
      %13 = sbr.rel (0) target = $region9
    $region8: #{biomedclip_forward.7} parent=1 // pred_region
      _
    $region9: #{biomedclip_forward.7} parent=1 // pred_fallthru
      _
    // Predicated region
    $region10: #{biomedclip_forward.7} parent=1 // pred_check
      _
    $region11: #{biomedclip_forward.7} parent=1 // pred_check_branch
      %15 = sbr.rel (0) target = $region13
    $region12: #{biomedclip_forward.7} parent=1 // pred_region
      _
    $region13: #{biomedclip_forward.7} parent=1 // pred_fallthru
      _
    // Predicated region
    $region14: #{biomedclip_forward.7} parent=1 // pred_check
      _
    $region15: #{biomedclip_forward.7} parent=1 // pred_check_branch
      %17 = sbr.rel (0) target = $region17
    $region16: #{biomedclip_forward.7} parent=1 // pred_region
      _
    $region17: #{biomedclip_forward.7} parent=1 // pred_fallthru
      _
    %v19 = vld [vmem:[%s0] sm:$0xf]
    %v20 = vld [vmem:[%s0 + $0x4] sm:$0xf]
    %v21 = vunpack.c.l.bf16 %v19
    %v22 = vunpack.c.l.bf16 %v20
    %v23 = vld [vmem:[%s1] sm:$0x1]
    %v24 = vld [vmem:[%s2] sm:$0x1]
    %v27 = vrot.slane %v22, 7
    %vm28 = vcmask 1041409
    %v29 = vsel %vm28, %v27, %v21
    %vm31 = vcmask 517120
    %v32 = vsel %vm31, %v29, 0.0
    %33 = vadd.xlane.f32.xlu0 %v32
    %v34 = vpop.xlane.xlu0 %33
    %v35 = vrcp.pop 64.0
    %v36 = vmul.f32 %v34, %v35
    %v38 = vrot.slane %v36, 1
    %v41 = vsub.f32 %v21, %v36
    %v42 = vsub.f32 %v22, %v38
    %v43 = vmul.f32 %v41, %v41
    %v44 = vmul.f32 %v42, %v42
    %v47 = vrot.slane %v44, 7
    %v48 = vsel %vm28, %v47, %v43
    %v50 = vsel %vm31, %v48, 0.0
    %51 = vadd.xlane.f32.xlu0 %v50
    %v52 = vpop.xlane.xlu0 %51
    %v53 = vmul.f32 %v52, %v35
    %v54 = vadd.f32 %v53, 1e-06
    %v55 = vrsqrt.pop %v54
    %v57 = vrot.slane %v55, 1
    %v60 = vmul.f32 %v41, %v55
    %v61 = vmul.f32 %v42, %v57
    %v63 = vlaneseq
    %v64 = vshrl.u32 %v63, 7
    %v65 = vsub.s32 0, %v64
    %v66 = vrot.slane %v23, %v65
    %v68 = vmul.f32 %v60, %v66
    %v69 = vmul.f32 %v61, %v66
    %v71 = vlaneseq
    %v72 = vshrl.u32 %v71, 7
    %v73 = vsub.s32 0, %v72
    %v74 = vrot.slane %v24, %v73
    %v76 = vadd.f32 %v68, %v74
    %v77 = vadd.f32 %v69, %v74
    %v78 = vpack.c.bf16 %v76, %v76
    %v79 = vpack.c.bf16 %v77, %v77
    %v80 = vld [vmem:[%s3] sm:$0xf]
    %v81 = vld [vmem:[%s3 + $0x4] sm:$0xf]
    %v82 = vld [vmem:[%s3 + $0x8] sm:$0xf]
    %v83 = vld [vmem:[%s3 + $0xc] sm:$0xf]
    %v84 = vld [vmem:[%s3 + $0x10] sm:$0xf]
    %v85 = vld [vmem:[%s3 + $0x14] sm:$0xf]
    %v86 = vld [vmem:[%s3 + $0x18] sm:$0xf]
    %v87 = vld [vmem:[%s3 + $0x1c] sm:$0xf]
    %v90 = vunpack.c.l.b16 %v78
    %v91 = vunpack.c.l.b16 %v79
    %v92 = vrot.slane %v91, 7
    %v93 = vsel %vm28, %v92, %v90
    %v94 = vpack.c.b16 %v93, %v93
    %v103 = vunpack.c.l.b16 %v80
    %v104 = vunpack.c.l.b16 %v81
    %v105 = vunpack.c.l.b16 %v82
    %v106 = vunpack.c.l.b16 %v83
    %v107 = vunpack.c.l.b16 %v84
    %v108 = vunpack.c.l.b16 %v85
    %v109 = vunpack.c.l.b16 %v86
    %v110 = vunpack.c.l.b16 %v87
    %v111 = vpack.c.b16 %v104, %v103
    %v112 = vpack.c.b16 %v106, %v105
    %v113 = vpack.c.b16 %v108, %v107
    %v114 = vpack.c.b16 %v110, %v109
    %vm119 = vcmask 523264
    %v121 = vsel %vm119, %v94, 0
    %123 = vmatprep.subr.bf16.mxu0 0
    %124 = vmatpush1.bf16.msra.mxu0 %v111
    %125 = vmatprep.subr.bf16.mxu0 0
    %126 = vmatpush1.bf16.msra.mxu0 %v112
    %127 = vmatprep.subr.bf16.mxu0 0
    %128 = vmatpush1.bf16.msra.mxu0 %v113
    %129 = vmatprep.subr.bf16.mxu0 0
    %130 = vmatpush1.bf16.msra.mxu0 %v114
    %131 = vmatprep.subr.bf16.mxu0 0
    %132 = vmatpush1.bf16.msra.mxu0 0
    %133 = vmatprep.subr.bf16.mxu0 0
    %134 = vmatpush1.bf16.msra.mxu0 0
    %135 = vmatprep.subr.bf16.mxu0 0
    %136 = vmatpush1.bf16.msra.mxu0 0
    %137 = vmatprep.subr.bf16.mxu0 0
    %138 = vmatpush1.bf16.msra.mxu0 0
    %139 = vmatprep.subr.bf16.mxu0 0
    %140 = vmatpush1.bf16.msra.mxu0 0
    %141 = vmatprep.subr.bf16.mxu0 0
    %142 = vmatpush1.bf16.msra.mxu0 0
    %143 = vmatprep.subr.bf16.mxu0 0
    %144 = vmatpush1.bf16.msra.mxu0 0
    %145 = vmatprep.subr.bf16.mxu0 0
    %146 = vmatpush1.bf16.msra.mxu0 0
    %147 = vmatprep.subr.bf16.mxu0 0
    %148 = vmatpush1.bf16.msra.mxu0 0
    %149 = vmatprep.subr.bf16.mxu0 0
    %150 = vmatpush1.bf16.msra.mxu0 0
    %151 = vmatprep.subr.bf16.mxu0 0
    %152 = vmatpush1.bf16.msra.mxu0 0
    %153 = vmatprep.subr.bf16.mxu0 0
    %154 = vmatpush1.bf16.msra.mxu0 0
    %155 = vmatprep.mubr.bf16.mxu0 0
    %156 = vmatmul.mubr.bf16.gmra.mrb[0].mxu0 %v121
    %v157 = vpop.f32.mrb[0].mxu0
    %v158 = vadd.f32 0.0, %v157
    %v159 = vpop.f32.mrb[0].mxu0
    %v160 = vpop.f32.mrb[0].mxu0
    %v161 = vpop.f32.mrb[0].mxu0
    %162 = vdwg.mxu0
    %v163 = vmul.f32 %v158, %v158
    %vm164 = vcmask 254976
    %v165 = vsel %vm164, %v163, 0.0
    %166 = vadd.xlane.f32.xlu0 %v165
    %v167 = vpop.xlane.xlu0 %166
    %v168 = vadd.f32 %v167, 1e-12
    %v169 = vrsqrt.pop %v168
    %v170 = vmul.f32 %v158, %v169
    %171 = vst.msk [vmem:[#allocation2] sm:$0x3] %vm164, %v170
    // Predicated region
    $region18: #{biomedclip_forward.7} parent=1 // pred_check
      _
    $region19: #{biomedclip_forward.7} parent=1 // pred_check_branch
      %173 = sbr.rel (0) target = $region21
    $region20: #{biomedclip_forward.7} parent=1 // pred_region
      %s175 = ssub.s32 32, 32
      %176 = vsyncadd [#allocation3], %s175
      %s178 = sshll.u32 [#allocation2], 4
      %s179 = int_to_ptr.vmem [resolvable:$true] %s178
      %181 = dma.vmem_to_hbm [thread:$0]  %s179, 32, %s4, [#allocation3]
    $region21: #{biomedclip_forward.7} parent=1 // pred_fallthru
      _
    // Predicated region
    $region22: #{biomedclip_forward.7} parent=1 // pred_check
      _
    $region23: #{biomedclip_forward.7} parent=1 // pred_check_branch
      %183 = sbr.rel (0) target = $region25
    $region24: #{biomedclip_forward.7} parent=1 // pred_region
      %184 = dma.done [#allocation3], 32
    $region25: #{biomedclip_forward.7} parent=1 // pred_fallthru
      _
    %185 = vsyncpa [#allocation3], 1

// kernel: biomedclip_forward.4
$region0: #{biomedclip_forward.4}
  #allocation0 [shape = 'u32[]', space=smem, size = 0x4, offset = 0x4, fixed_abs, tag = 'smem constant byte address 0x4 - core index']
  #allocation1 [shape = 'u32[144,128]{1,0:T(1,128)}', space=vmem, size = 0x12000, scoped, tag = 'internal scratch']
  %s0 = inlined_call_operand.vmem [shape: bf16[2,8,768], index: 0, kind: input, shape index: {}]
  %s1 = inlined_call_operand.vmem [shape: bf16[768,64], index: 1, kind: input, shape index: {}]
  %s2 = inlined_call_operand.vmem [shape: f32[8,64], index: 2, kind: input, shape index: {}]
  %s3 = inlined_call_operand.vmem [shape: bf16[2,8,64], index: 3, kind: output, shape index: {}]
  %s4 = sld [smem:[#allocation0]]
  $region45: #{biomedclip_forward.4} parent=0
    _
  %s6 = ssub.s32 1, %s4
  %s7 = scalar_select 0, %s6, %s4
  loop: start=0, step=1, limit=4
  $region2: #{biomedclip_forward.4} parent=0 // loop_pre_header
    _
  $region3: #{biomedclip_forward.4} parent=0 // loop_header
    %s9 = sphi 0, %s13
    %p10 = scmp.ge.s32.totalorder %s9, 4
    %s19 = sphi 0, %s21
    %s22 = sphi 0, %s19
    %s23 = sphi 0, %s22
    %s39 = sphi 0, %s23
    %s43 = sphi 0, %s43
    %s45 = sphi 0, %s43
    %s46 = sphi 0, %s45
    %s60 = sphi 0, %s46
    %s64 = sphi 0, %s64
    %s66 = sphi 0, %s64
    %s67 = sphi 0, %s66
    %s81 = sphi 0, %s67
    %s87 = sphi 0, %s89
    %s90 = sphi 0, %s87
    %s91 = sphi 0, %s90
    %s107 = sphi 0, %s91
  $region4: #{biomedclip_forward.4} parent=0 // loop_header_branch
    %12 = sbr.rel (%p10) target = $region8
  $region5: #{biomedclip_forward.4} parent=0 // loop_body
    %s14 = ssub.s32 %s9, 1
    %s15 = ssub.s32 %s9, 2
    %s16 = sadd.s32 %s9, 1
    %s17 = ssub.s32 %s9, %s16
    %p18 = scmp.eq.s32.totalorder %s17, 0
    %s20 = sadd.s32 %s19, 1
    %s21 = scalar_select %p18, %s19, %s20
    %p24 = pneg %p18
    %p25 = scmp.eq.s32.totalorder %s9, 1
    %p26 = por %p24, %p25
    %p27 = scmp.ne.s32.totalorder %s19, %s22
    %p28 = scmp.eq.s32.totalorder %s9, 0
    %p29 = por %p27, %p28
    %p30 = scmp.ne.s32.totalorder %s19, %s22
    %p31 = scmp.eq.s32.totalorder %s14, 1
    %p32 = por %p30, %p31
    %p33 = scmp.ne.s32.totalorder %s22, %s23
    %p34 = scmp.eq.s32.totalorder %s14, 0
    %p35 = por %p33, %p34
    %p36 = scmp.ne.s32.totalorder %s22, %s23
    %p37 = scmp.eq.s32.totalorder %s15, 1
    %p38 = por %p36, %p37
    %p40 = scmp.ne.s32.totalorder %s23, %s39
    %p41 = scmp.eq.s32.totalorder %s15, 0
    %p42 = por %p40, %p41
    %s44 = sadd.s32 %s43, 1
    %p47 = scmp.eq.s32.totalorder %s9, 1
    %p48 = scmp.ne.s32.totalorder %s43, %s45
    %p49 = scmp.eq.s32.totalorder %s9, 0
    %p50 = por %p48, %p49
    %p51 = scmp.ne.s32.totalorder %s43, %s45
    %p52 = scmp.eq.s32.totalorder %s14, 1
    %p53 = por %p51, %p52
    %p54 = scmp.ne.s32.totalorder %s45, %s46
    %p55 = scmp.eq.s32.totalorder %s14, 0
    %p56 = por %p54, %p55
    %p57 = scmp.ne.s32.totalorder %s45, %s46
    %p58 = scmp.eq.s32.totalorder %s15, 1
    %p59 = por %p57, %p58
    %p61 = scmp.ne.s32.totalorder %s46, %s60
    %p62 = scmp.eq.s32.totalorder %s15, 0
    %p63 = por %p61, %p62
    %s65 = sadd.s32 %s64, 1
    %p68 = scmp.eq.s32.totalorder %s9, 1
    %p69 = scmp.ne.s32.totalorder %s64, %s66
    %p70 = scmp.eq.s32.totalorder %s9, 0
    %p71 = por %p69, %p70
    %p72 = scmp.ne.s32.totalorder %s64, %s66
    %p73 = scmp.eq.s32.totalorder %s14, 1
    %p74 = por %p72, %p73
    %p75 = scmp.ne.s32.totalorder %s66, %s67
    %p76 = scmp.eq.s32.totalorder %s14, 0
    %p77 = por %p75, %p76
    %p78 = scmp.ne.s32.totalorder %s66, %s67
    %p79 = scmp.eq.s32.totalorder %s15, 1
    %p80 = por %p78, %p79
    %p82 = scmp.ne.s32.totalorder %s67, %s81
    %p83 = scmp.eq.s32.totalorder %s15, 0
    %p84 = por %p82, %p83
    %s85 = ssub.s32 %s9, %s16
    %p86 = scmp.eq.s32.totalorder %s85, 0
    %s88 = sadd.s32 %s87, 1
    %s89 = scalar_select %p86, %s87, %s88
    %p92 = pneg %p86
    %p93 = scmp.eq.s32.totalorder %s9, 1
    %p94 = por %p92, %p93
    %p95 = scmp.ne.s32.totalorder %s87, %s90
    %p96 = scmp.eq.s32.totalorder %s9, 0
    %p97 = por %p95, %p96
    %p98 = scmp.ne.s32.totalorder %s87, %s90
    %p99 = scmp.eq.s32.totalorder %s14, 1
    %p100 = por %p98, %p99
    %p101 = scmp.ne.s32.totalorder %s90, %s91
    %p102 = scmp.eq.s32.totalorder %s14, 0
    %p103 = por %p101, %p102
    %p104 = scmp.ne.s32.totalorder %s90, %s91
    %p105 = scmp.eq.s32.totalorder %s15, 1
    %p106 = por %p104, %p105
    %p108 = scmp.ne.s32.totalorder %s91, %s107
    %p109 = scmp.eq.s32.totalorder %s15, 0
    %p110 = por %p108, %p109
    %p111 = scmp.le.s32.totalorder 1, %s9
    %p112 = scmp.lt.s32.totalorder %s9, 3
    %p113 = pnand %p111, %p112
    %p114 = pneg %p113
    // Predicated region
    $region9: #{biomedclip_forward.4} parent=5 // pred_check
      _
    $region10: #{biomedclip_forward.4} parent=5 // pred_check_branch
      %116 = sbr.rel (%p113) target = $region12
    $region11: #{biomedclip_forward.4} parent=5 // pred_region
      %s117 = ssub.s32 %s9, 1
      // Predicated region
      $region13: #{biomedclip_forward.4} parent=11 // pred_check
        %p118 = pneg %p56
      $region14: #{biomedclip_forward.4} parent=11 // pred_check_branch
        %120 = sbr.rel (%p118) target = $region16
      $region15: #{biomedclip_forward.4} parent=11 // pred_region
        _
      $region16: #{biomedclip_forward.4} parent=11 // pred_fallthru
        _
      // Predicated region
      $region17: #{biomedclip_forward.4} parent=11 // pred_check
        %p121 = pneg %p77
      $region18: #{biomedclip_forward.4} parent=11 // pred_check_branch
        %123 = sbr.rel (%p121) target = $region20
      $region19: #{biomedclip_forward.4} parent=11 // pred_region
        _
      $region20: #{biomedclip_forward.4} parent=11 // pred_fallthru
        _
    $region12: #{biomedclip_forward.4} parent=5 // pred_fallthru
      _
    %p124 = scmp.lt.s32.totalorder %s9, 2
    // Predicated region
    $region21: #{biomedclip_forward.4} parent=5 // pred_check
      %p125 = pneg %p124
    $region22: #{biomedclip_forward.4} parent=5 // pred_check_branch
      %127 = sbr.rel (%p125) target = $region24
    $region23: #{biomedclip_forward.4} parent=5 // pred_region
      // Predicated region
      $region25: #{biomedclip_forward.4} parent=23 // pred_check
        %p128 = pneg %p29
      $region26: #{biomedclip_forward.4} parent=23 // pred_check_branch
        %130 = sbr.rel (%p128) target = $region28
      $region27: #{biomedclip_forward.4} parent=23 // pred_region
        %p131 = scmp.lt.s32.totalorder %s9, 1
        %s132 = scalar_select %p131, %s9, 1
        %s133 = smul.addr %s132, 6
        %s134 = smul.addr %s133, 4
        %s135 = scalar_lea.vmem %s0, %s134
      $region28: #{biomedclip_forward.4} parent=23 // pred_fallthru
        _
    $region24: #{biomedclip_forward.4} parent=5 // pred_fallthru
      _
    %p136 = scmp.le.s32.totalorder 1, %s9
    %p137 = scmp.lt.s32.totalorder %s9, 3
    %p138 = pnand %p136, %p137
    %p139 = pneg %p138
    // Predicated region
    $region29: #{biomedclip_forward.4} parent=5 // pred_check
      _
    $region30: #{biomedclip_forward.4} parent=5 // pred_check_branch
      %141 = sbr.rel (%p138) target = $region32
    $region31: #{biomedclip_forward.4} parent=5 // pred_region
      %s142 = ssub.s32 %s9, 1
      %p143 = scmp.lt.s32.totalorder %s14, 1
      %s144 = scalar_select %p143, %s14, 1
      %s145 = smul.addr %s144, 6
      %s146 = smul.addr %s145, 4
      %s147 = scalar_lea.vmem %s0, %s146
      %p148 = pneg %p35
      %p149 = pneg %p32
      %p150 = pneg %p56
      %p151 = pneg %p53
      %p152 = pneg %p77
      %p153 = pneg %p74
      %p154 = pneg %p103
      %p155 = pneg %p100
      %p156 = scmp.lt.s32.totalorder %s14, 1
      %s157 = scalar_select %p156, %s14, 1
      %s158 = smul.addr %s157, 4
      %s159 = scalar_lea.vmem %s3, %s158
      %p160 = scmp.lt.s32.totalorder %s14, 1
      %s161 = scalar_select %p160, %s14, 1
      %s162 = smul.addr %s161, 6
      %s163 = smul.addr %s162, 4
      %s164 = scalar_lea.vmem %s0, %s163
      %p165 = scmp.lt.s32.totalorder %s14, 1
      %s166 = scalar_select %p165, %s14, 1
      %s167 = smul.addr %s166, 4
      %s168 = scalar_lea.vmem %s3, %s167
      %v170 = vld [vmem:[%s164] sm:$0xff]
      %v171 = vld [vmem:[%s164 + $0x8] sm:$0xff]
      %v172 = vld [vmem:[%s164 + $0x10] sm:$0xff]
      %v173 = vld [vmem:[%s1] sm:$0xf]
      %v174 = vld [vmem:[%s1 + $0x4] sm:$0xf]
      %v175 = vld [vmem:[%s1 + $0x8] sm:$0xf]
      %v176 = vld [vmem:[%s1 + $0xc] sm:$0xf]
      %v177 = vld [vmem:[%s1 + $0x10] sm:$0xf]
      %v178 = vld [vmem:[%s1 + $0x14] sm:$0xf]
      %v179 = vld [vmem:[%s1 + $0x18] sm:$0xf]
      %v180 = vld [vmem:[%s1 + $0x1c] sm:$0xf]
      %v181 = vld [vmem:[%s1 + $0x20] sm:$0xf]
      %v182 = vld [vmem:[%s1 + $0x24] sm:$0xf]
      %v183 = vld [vmem:[%s1 + $0x28] sm:$0xf]
      %v184 = vld [vmem:[%s1 + $0x2c] sm:$0xf]
      %v185 = vld [vmem:[%s1 + $0x30] sm:$0xf]
      %v186 = vld [vmem:[%s1 + $0x34] sm:$0xf]
      %v187 = vld [vmem:[%s1 + $0x38] sm:$0xf]
      %v188 = vld [vmem:[%s1 + $0x3c] sm:$0xf]
      %v189 = vld [vmem:[%s1 + $0x40] sm:$0xf]
      %v190 = vld [vmem:[%s1 + $0x44] sm:$0xf]
      %v191 = vld [vmem:[%s1 + $0x48] sm:$0xf]
      %v192 = vld [vmem:[%s1 + $0x4c] sm:$0xf]
      %v193 = vld [vmem:[%s1 + $0x50] sm:$0xf]
      %v194 = vld [vmem:[%s1 + $0x54] sm:$0xf]
      %v195 = vld [vmem:[%s1 + $0x58] sm:$0xf]
      %v196 = vld [vmem:[%s1 + $0x5c] sm:$0xf]
      %v197 = vld [vmem:[%s1 + $0x60] sm:$0xf]
      %v198 = vld [vmem:[%s1 + $0x64] sm:$0xf]
      %v199 = vld [vmem:[%s1 + $0x68] sm:$0xf]
      %v200 = vld [vmem:[%s1 + $0x6c] sm:$0xf]
      %v201 = vld [vmem:[%s1 + $0x70] sm:$0xf]
      %v202 = vld [vmem:[%s1 + $0x74] sm:$0xf]
      %v203 = vld [vmem:[%s1 + $0x78] sm:$0xf]
      %v204 = vld [vmem:[%s1 + $0x7c] sm:$0xf]
      %v205 = vld [vmem:[%s1 + $0x80] sm:$0xf]
      %v206 = vld [vmem:[%s1 + $0x84] sm:$0xf]
      %v207 = vld [vmem:[%s1 + $0x88] sm:$0xf]
      %v208 = vld [vmem:[%s1 + $0x8c] sm:$0xf]
      %v209 = vld [vmem:[%s1 + $0x90] sm:$0xf]
      %v210 = vld [vmem:[%s1 + $0x94] sm:$0xf]
      %v211 = vld [vmem:[%s1 + $0x98] sm:$0xf]
      %v212 = vld [vmem:[%s1 + $0x9c] sm:$0xf]
      %v213 = vld [vmem:[%s1 + $0xa0] sm:$0xf]
      %v214 = vld [vmem:[%s1 + $0xa4] sm:$0xf]
      %v215 = vld [vmem:[%s1 + $0xa8] sm:$0xf]
      %v216 = vld [vmem:[%s1 + $0xac] sm:$0xf]
      %v217 = vld [vmem:[%s1 + $0xb0] sm:$0xf]
      %v218 = vld [vmem:[%s1 + $0xb4] sm:$0xf]
      %v219 = vld [vmem:[%s1 + $0xb8] sm:$0xf]
      %v220 = vld [vmem:[%s1 + $0xbc] sm:$0xf]
      %v221 = vld [vmem:[%s1 + $0xc0] sm:$0xf]
      %v222 = vld [vmem:[%s1 + $0xc4] sm:$0xf]
      %v223 = vld [vmem:[%s1 + $0xc8] sm:$0xf]
      %v224 = vld [vmem:[%s1 + $0xcc] sm:$0xf]
      %v225 = vld [vmem:[%s1 + $0xd0] sm:$0xf]
      %v226 = vld [vmem:[%s1 + $0xd4] sm:$0xf]
      %v227 = vld [vmem:[%s1 + $0xd8] sm:$0xf]
      %v228 = vld [vmem:[%s1 + $0xdc] sm:$0xf]
      %v229 = vld [vmem:[%s1 + $0xe0] sm:$0xf]
      %v230 = vld [vmem:[%s1 + $0xe4] sm:$0xf]
      %v231 = vld [vmem:[%s1 + $0xe8] sm:$0xf]
      %v232 = vld [vmem:[%s1 + $0xec] sm:$0xf]
      %v233 = vld [vmem:[%s1 + $0xf0] sm:$0xf]
      %v234 = vld [vmem:[%s1 + $0xf4] sm:$0xf]
      %v235 = vld [vmem:[%s1 + $0xf8] sm:$0xf]
      %v236 = vld [vmem:[%s1 + $0xfc] sm:$0xf]
      %v237 = vld [vmem:[%s1 + $0x100] sm:$0xf]
      %v238 = vld [vmem:[%s1 + $0x104] sm:$0xf]
      %v239 = vld [vmem:[%s1 + $0x108] sm:$0xf]
      %v240 = vld [vmem:[%s1 + $0x10c] sm:$0xf]
      %v241 = vld [vmem:[%s1 + $0x110] sm:$0xf]
      %v242 = vld [vmem:[%s1 + $0x114] sm:$0xf]
      %v243 = vld [vmem:[%s1 + $0x118] sm:$0xf]
      %v244 = vld [vmem:[%s1 + $0x11c] sm:$0xf]
      %v245 = vld [vmem:[%s1 + $0x120] sm:$0xf]
      %v246 = vld [vmem:[%s1 + $0x124] sm:$0xf]
      %v247 = vld [vmem:[%s1 + $0x128] sm:$0xf]
      %v248 = vld [vmem:[%s1 + $0x12c] sm:$0xf]
      %v249 = vld [vmem:[%s1 + $0x130] sm:$0xf]
      %v250 = vld [vmem:[%s1 + $0x134] sm:$0xf]
      %v251 = vld [vmem:[%s1 + $0x138] sm:$0xf]
      %v252 = vld [vmem:[%s1 + $0x13c] sm:$0xf]
      %v253 = vld [vmem:[%s1 + $0x140] sm:$0xf]
      %v254 = vld [vmem:[%s1 + $0x144] sm:$0xf]
      %v255 = vld [vmem:[%s1 + $0x148] sm:$0xf]
      %v256 = vld [vmem:[%s1 + $0x14c] sm:$0xf]
      %v257 = vld [vmem:[%s1 + $0x150] sm:$0xf]
      %v258 = vld [vmem:[%s1 + $0x154] sm:$0xf]
      %v259 = vld [vmem:[%s1 + $0x158] sm:$0xf]
      %v260 = vld [vmem:[%s1 + $0x15c] sm:$0xf]
      %v261 = vld [vmem:[%s1 + $0x160] sm:$0xf]
      %v262 = vld [vmem:[%s1 + $0x164] sm:$0xf]
      %v263 = vld [vmem:[%s1 + $0x168] sm:$0xf]
      %v264 = vld [vmem:[%s1 + $0x16c] sm:$0xf]
      %v265 = vld [vmem:[%s1 + $0x170] sm:$0xf]
      %v266 = vld [vmem:[%s1 + $0x174] sm:$0xf]
      %v267 = vld [vmem:[%s1 + $0x178] sm:$0xf]
      %v268 = vld [vmem:[%s1 + $0x17c] sm:$0xf]
      %v269 = vld [vmem:[%s2] sm:$0xff]
      %v273 = vunpack.c.l.b16 %v170
      %v274 = vunpack.c.h.b16 %v170
      %v275 = vunpack.c.l.b16 %v171
      %v276 = vunpack.c.h.b16 %v171
      %v277 = vunpack.c.l.b16 %v172
      %v278 = vunpack.c.h.b16 %v172
      %v279 = vpack.c.b16 %v273, %v273
      %v280 = vpack.c.b16 %v274, %v274
      %v281 = vpack.c.b16 %v275, %v275
      %v282 = vpack.c.b16 %v276, %v276
      %v283 = vpack.c.b16 %v277, %v277
      %v284 = vpack.c.b16 %v278, %v278
      %v387 = vunpack.c.l.b16 %v173
      %v388 = vunpack.c.l.b16 %v174
      %v389 = vunpack.c.l.b16 %v175
      %v390 = vunpack.c.l.b16 %v176
      %v391 = vunpack.c.l.b16 %v177
      %v392 = vunpack.c.l.b16 %v178
      %v393 = vunpack.c.l.b16 %v179
      %v394 = vunpack.c.l.b16 %v180
      %v395 = vunpack.c.l.b16 %v181
      %v396 = vunpack.c.l.b16 %v182
      %v397 = vunpack.c.l.b16 %v183
      %v398 = vunpack.c.l.b16 %v184
      %v399 = vunpack.c.l.b16 %v185
      %v400 = vunpack.c.l.b16 %v186
      %v401 = vunpack.c.l.b16 %v187
      %v402 = vunpack.c.l.b16 %v188
      %v403 = vunpack.c.l.b16 %v189
      %v404 = vunpack.c.l.b16 %v190
      %v405 = vunpack.c.l.b16 %v191
      %v406 = vunpack.c.l.b16 %v192
      %v407 = vunpack.c.l.b16 %v193
      %v408 = vunpack.c.l.b16 %v194
      %v409 = vunpack.c.l.b16 %v195
      %v410 = vunpack.c.l.b16 %v196
      %v411 = vunpack.c.l.b16 %v197
      %v412 = vunpack.c.l.b16 %v198
      %v413 = vunpack.c.l.b16 %v199
      %v414 = vunpack.c.l.b16 %v200
      %v415 = vunpack.c.l.b16 %v201
      %v416 = vunpack.c.l.b16 %v202
      %v417 = vunpack.c.l.b16 %v203
      %v418 = vunpack.c.l.b16 %v204
      %v419 = vunpack.c.l.b16 %v205
      %v420 = vunpack.c.l.b16 %v206
      %v421 = vunpack.c.l.b16 %v207
      %v422 = vunpack.c.l.b16 %v208
      %v423 = vunpack.c.l.b16 %v209
      %v424 = vunpack.c.l.b16 %v210
      %v425 = vunpack.c.l.b16 %v211
      %v426 = vunpack.c.l.b16 %v212
      %v427 = vunpack.c.l.b16 %v213
      %v428 = vunpack.c.l.b16 %v214
      %v429 = vunpack.c.l.b16 %v215
      %v430 = vunpack.c.l.b16 %v216
      %v431 = vunpack.c.l.b16 %v217
      %v432 = vunpack.c.l.b16 %v218
      %v433 = vunpack.c.l.b16 %v219
      %v434 = vunpack.c.l.b16 %v220
      %v435 = vunpack.c.l.b16 %v221
      %v436 = vunpack.c.l.b16 %v222
      %v437 = vunpack.c.l.b16 %v223
      %v438 = vunpack.c.l.b16 %v224
      %v439 = vunpack.c.l.b16 %v225
      %v440 = vunpack.c.l.b16 %v226
      %v441 = vunpack.c.l.b16 %v227
      %v442 = vunpack.c.l.b16 %v228
      %v443 = vunpack.c.l.b16 %v229
      %v444 = vunpack.c.l.b16 %v230
      %v445 = vunpack.c.l.b16 %v231
      %v446 = vunpack.c.l.b16 %v232
      %v447 = vunpack.c.l.b16 %v233
      %v448 = vunpack.c.l.b16 %v234
      %v449 = vunpack.c.l.b16 %v235
      %v450 = vunpack.c.l.b16 %v236
      %v451 = vunpack.c.l.b16 %v237
      %v452 = vunpack.c.l.b16 %v238
      %v453 = vunpack.c.l.b16 %v239
      %v454 = vunpack.c.l.b16 %v240
      %v455 = vunpack.c.l.b16 %v241
      %v456 = vunpack.c.l.b16 %v242
      %v457 = vunpack.c.l.b16 %v243
      %v458 = vunpack.c.l.b16 %v244
      %v459 = vunpack.c.l.b16 %v245
      %v460 = vunpack.c.l.b16 %v246
      %v461 = vunpack.c.l.b16 %v247
      %v462 = vunpack.c.l.b16 %v248
      %v463 = vunpack.c.l.b16 %v249
      %v464 = vunpack.c.l.b16 %v250
      %v465 = vunpack.c.l.b16 %v251
      %v466 = vunpack.c.l.b16 %v252
      %v467 = vunpack.c.l.b16 %v253
      %v468 = vunpack.c.l.b16 %v254
      %v469 = vunpack.c.l.b16 %v255
      %v470 = vunpack.c.l.b16 %v256
      %v471 = vunpack.c.l.b16 %v257
      %v472 = vunpack.c.l.b16 %v258
      %v473 = vunpack.c.l.b16 %v259
      %v474 = vunpack.c.l.b16 %v260
      %v475 = vunpack.c.l.b16 %v261
      %v476 = vunpack.c.l.b16 %v262
      %v477 = vunpack.c.l.b16 %v263
      %v478 = vunpack.c.l.b16 %v264
      %v479 = vunpack.c.l.b16 %v265
      %v480 = vunpack.c.l.b16 %v266
      %v481 = vunpack.c.l.b16 %v267
      %v482 = vunpack.c.l.b16 %v268
      %v483 = vpack.c.b16 %v388, %v387
      %v484 = vpack.c.b16 %v390, %v389
      %v485 = vpack.c.b16 %v392, %v391
      %v486 = vpack.c.b16 %v394, %v393
      %v487 = vpack.c.b16 %v396, %v395
      %v488 = vpack.c.b16 %v398, %v397
      %v489 = vpack.c.b16 %v400, %v399
      %v490 = vpack.c.b16 %v402, %v401
      %v491 = vpack.c.b16 %v404, %v403
      %v492 = vpack.c.b16 %v406, %v405
      %v493 = vpack.c.b16 %v408, %v407
      %v494 = vpack.c.b16 %v410, %v409
      %v495 = vpack.c.b16 %v412, %v411
      %v496 = vpack.c.b16 %v414, %v413
      %v497 = vpack.c.b16 %v416, %v415
      %v498 = vpack.c.b16 %v418, %v417
      %v499 = vpack.c.b16 %v420, %v419
      %v500 = vpack.c.b16 %v422, %v421
      %v501 = vpack.c.b16 %v424, %v423
      %v502 = vpack.c.b16 %v426, %v425
      %v503 = vpack.c.b16 %v428, %v427
      %v504 = vpack.c.b16 %v430, %v429
      %v505 = vpack.c.b16 %v432, %v431
      %v506 = vpack.c.b16 %v434, %v433
      %v507 = vpack.c.b16 %v436, %v435
      %v508 = vpack.c.b16 %v438, %v437
      %v509 = vpack.c.b16 %v440, %v439
      %v510 = vpack.c.b16 %v442, %v441
      %v511 = vpack.c.b16 %v444, %v443
      %v512 = vpack.c.b16 %v446, %v445
      %v513 = vpack.c.b16 %v448, %v447
      %v514 = vpack.c.b16 %v450, %v449
      %v515 = vpack.c.b16 %v452, %v451
      %v516 = vpack.c.b16 %v454, %v453
      %v517 = vpack.c.b16 %v456, %v455
      %v518 = vpack.c.b16 %v458, %v457
      %v519 = vpack.c.b16 %v460, %v459
      %v520 = vpack.c.b16 %v462, %v461
      %v521 = vpack.c.b16 %v464, %v463
      %v522 = vpack.c.b16 %v466, %v465
      %v523 = vpack.c.b16 %v468, %v467
      %v524 = vpack.c.b16 %v470, %v469
      %v525 = vpack.c.b16 %v472, %v471
      %v526 = vpack.c.b16 %v474, %v473
      %v527 = vpack.c.b16 %v476, %v475
      %v528 = vpack.c.b16 %v478, %v477
      %v529 = vpack.c.b16 %v480, %v479
      %v530 = vpack.c.b16 %v482, %v481
      %579 = vmatprep.subr.bf16.mxu0 0
      %580 = vmatpush1.bf16.msra.mxu0 %v483
      %581 = vmatprep.subr.bf16.mxu0 0
      %582 = vmatpush1.bf16.msra.mxu0 %v484
      %583 = vmatprep.subr.bf16.mxu0 0
      %584 = vmatpush1.bf16.msra.mxu0 %v485
      %585 = vmatprep.subr.bf16.mxu0 0
      %586 = vmatpush1.bf16.msra.mxu0 %v486
      %587 = vmatprep.subr.bf16.mxu0 0
      %588 = vmatpush1.bf16.msra.mxu0 %v487
      %589 = vmatprep.subr.bf16.mxu0 0
      %590 = vmatpush1.bf16.msra.mxu0 %v488
      %591 = vmatprep.subr.bf16.mxu0 0
      %592 = vmatpush1.bf16.msra.mxu0 %v489
      %593 = vmatprep.subr.bf16.mxu0 0
      %594 = vmatpush1.bf16.msra.mxu0 %v490
      %595 = vmatprep.subr.bf16.mxu0 0
      %596 = vmatpush1.bf16.msra.mxu0 %v491
      %597 = vmatprep.subr.bf16.mxu0 0
      %598 = vmatpush1.bf16.msra.mxu0 %v492
      %599 = vmatprep.subr.bf16.mxu0 0
      %600 = vmatpush1.bf16.msra.mxu0 %v493
      %601 = vmatprep.subr.bf16.mxu0 0
      %602 = vmatpush1.bf16.msra.mxu0 %v494
      %603 = vmatprep.subr.bf16.mxu0 0
      %604 = vmatpush1.bf16.msra.mxu0 %v495
      %605 = vmatprep.subr.bf16.mxu0 0
      %606 = vmatpush1.bf16.msra.mxu0 %v496
      %607 = vmatprep.subr.bf16.mxu0 0
      %608 = vmatpush1.bf16.msra.mxu0 %v497
      %609 = vmatprep.subr.bf16.mxu0 0
      %610 = vmatpush1.bf16.msra.mxu0 %v498
      %611 = vmatprep.mubr.bf16.mxu0 %v280
      %612 = vmatmul.mubr.bf16.gmra.mrb[0].mxu0 %v279
      %v613 = vpop.f32.mrb[0].mxu0
      %v614 = vadd.f32 %v269, %v613
      %v615 = vpop.f32.mrb[0].mxu0
      %v616 = vpop.f32.mrb[0].mxu0
      %v617 = vpop.f32.mrb[0].mxu0
      %618 = vdwg.mxu0
      %619 = vmatprep.subr.bf16.mxu0 0
      %620 = vmatpush1.bf16.msra.mxu0 %v499
      %621 = vmatprep.subr.bf16.mxu0 0
      %622 = vmatpush1.bf16.msra.mxu0 %v500
      %623 = vmatprep.subr.bf16.mxu0 0
      %624 = vmatpush1.bf16.msra.mxu0 %v501
      %625 = vmatprep.subr.bf16.mxu0 0
      %626 = vmatpush1.bf16.msra.mxu0 %v502
      %627 = vmatprep.subr.bf16.mxu0 0
      %628 = vmatpush1.bf16.msra.mxu0 %v503
      %629 = vmatprep.subr.bf16.mxu0 0
      %630 = vmatpush1.bf16.msra.mxu0 %v504
      %631 = vmatprep.subr.bf16.mxu0 0
      %632 = vmatpush1.bf16.msra.mxu0 %v505
      %633 = vmatprep.subr.bf16.mxu0 0
      %634 = vmatpush1.bf16.msra.mxu0 %v506
      %635 = vmatprep.subr.bf16.mxu0 0
      %636 = vmatpush1.bf16.msra.mxu0 %v507
      %637 = vmatprep.subr.bf16.mxu0 0
      %638 = vmatpush1.bf16.msra.mxu0 %v508
      %639 = vmatprep.subr.bf16.mxu0 0
      %640 = vmatpush1.bf16.msra.mxu0 %v509
      %641 = vmatprep.subr.bf16.mxu0 0
      %642 = vmatpush1.bf16.msra.mxu0 %v510
      %643 = vmatprep.subr.bf16.mxu0 0
      %644 = vmatpush1.bf16.msra.mxu0 %v511
      %645 = vmatprep.subr.bf16.mxu0 0
      %646 = vmatpush1.bf16.msra.mxu0 %v512
      %647 = vmatprep.subr.bf16.mxu0 0
      %648 = vmatpush1.bf16.msra.mxu0 %v513
      %649 = vmatprep.subr.bf16.mxu0 0
      %650 = vmatpush1.bf16.msra.mxu0 %v514
      %651 = vmatprep.mubr.bf16.mxu0 %v282
      %652 = vmatmul.mubr.bf16.gmra.mrb[0].mxu0 %v281
      %v653 = vpop.f32.mrb[0].mxu0
      %v654 = vadd.f32 %v614, %v653
      %v655 = vpop.f32.mrb[0].mxu0
      %v656 = vpop.f32.mrb[0].mxu0
      %v657 = vpop.f32.mrb[0].mxu0
      %658 = vdwg.mxu0
      %659 = vmatprep.subr.bf16.mxu0 0
      %660 = vmatpush1.bf16.msra.mxu0 %v515
      %661 = vmatprep.subr.bf16.mxu0 0
      %662 = vmatpush1.bf16.msra.mxu0 %v516
      %663 = vmatprep.subr.bf16.mxu0 0
      %664 = vmatpush1.bf16.msra.mxu0 %v517
      %665 = vmatprep.subr.bf16.mxu0 0
      %666 = vmatpush1.bf16.msra.mxu0 %v518
      %667 = vmatprep.subr.bf16.mxu0 0
      %668 = vmatpush1.bf16.msra.mxu0 %v519
      %669 = vmatprep.subr.bf16.mxu0 0
      %670 = vmatpush1.bf16.msra.mxu0 %v520
      %671 = vmatprep.subr.bf16.mxu0 0
      %672 = vmatpush1.bf16.msra.mxu0 %v521
      %673 = vmatprep.subr.bf16.mxu0 0
      %674 = vmatpush1.bf16.msra.mxu0 %v522
      %675 = vmatprep.subr.bf16.mxu0 0
      %676 = vmatpush1.bf16.msra.mxu0 %v523
      %677 = vmatprep.subr.bf16.mxu0 0
      %678 = vmatpush1.bf16.msra.mxu0 %v524
      %679 = vmatprep.subr.bf16.mxu0 0
      %680 = vmatpush1.bf16.msra.mxu0 %v525
      %681 = vmatprep.subr.bf16.mxu0 0
      %682 = vmatpush1.bf16.msra.mxu0 %v526
      %683 = vmatprep.subr.bf16.mxu0 0
      %684 = vmatpush1.bf16.msra.mxu0 %v527
      %685 = vmatprep.subr.bf16.mxu0 0
      %686 = vmatpush1.bf16.msra.mxu0 %v528
      %687 = vmatprep.subr.bf16.mxu0 0
      %688 = vmatpush1.bf16.msra.mxu0 %v529
      %689 = vmatprep.subr.bf16.mxu0 0
      %690 = vmatpush1.bf16.msra.mxu0 %v530
      %691 = vmatprep.mubr.bf16.mxu0 %v284
      %692 = vmatmul.mubr.bf16.gmra.mrb[0].mxu0 %v283
      %v693 = vpop.f32.mrb[0].mxu0
      %v694 = vadd.f32 %v654, %v693
      %v695 = vpop.f32.mrb[0].mxu0
      %v696 = vpop.f32.mrb[0].mxu0
      %v697 = vpop.f32.mrb[0].mxu0
      %698 = vdwg.mxu0
      %v699 = vpack.c.bf16 %v694, %v694
      %vm700 = vcmask 519168
      %701 = vst.msk [vmem:[%s168] sm:$0xf] %vm700, %v699
      %p702 = scmp.lt.s32.totalorder %s14, 1
      %s703 = scalar_select %p702, %s14, 1
      %s704 = smul.addr %s703, 4
      %s705 = scalar_lea.vmem %s3, %s704
      // Predicated region
      $region33: #{biomedclip_forward.4} parent=31 // pred_check
        %p706 = pneg %p100
      $region34: #{biomedclip_forward.4} parent=31 // pred_check_branch
        %708 = sbr.rel (%p706) target = $region36
      $region35: #{biomedclip_forward.4} parent=31 // pred_region
        _
      $region36: #{biomedclip_forward.4} parent=31 // pred_fallthru
        _
    $region32: #{biomedclip_forward.4} parent=5 // pred_fallthru
      _
    %p709 = scmp.le.s32.totalorder 2, %s9
    // Predicated region
    $region37: #{biomedclip_forward.4} parent=5 // pred_check
      %p710 = pneg %p709
    $region38: #{biomedclip_forward.4} parent=5 // pred_check_branch
      %712 = sbr.rel (%p710) target = $region40
    $region39: #{biomedclip_forward.4} parent=5 // pred_region
      %s713 = ssub.s32 %s9, 2
      // Predicated region
      $region41: #{biomedclip_forward.4} parent=39 // pred_check
        %p714 = pneg %p106
      $region42: #{biomedclip_forward.4} parent=39 // pred_check_branch
        %716 = sbr.rel (%p714) target = $region44
      $region43: #{biomedclip_forward.4} parent=39 // pred_region
        %p717 = scmp.lt.s32.totalorder %s15, 1
        %s718 = scalar_select %p717, %s15, 1
        %s719 = smul.addr %s718, 4
        %s720 = scalar_lea.vmem %s3, %s719
      $region44: #{biomedclip_forward.4} parent=39 // pred_fallthru
        _
    $region40: #{biomedclip_forward.4} parent=5 // pred_fallthru
      _
  $region6: #{biomedclip_forward.4} parent=0 // loop_footer
    %s13 = sadd.s32 1, %s9
  $region7: #{biomedclip_forward.4} parent=0 // loop_footer_branch
    %8 = sbr.rel target = $region3
  $region8: #{biomedclip_forward.4} parent=0 // loop_exit
    _

// kernel: biomedclip_forward.5
$region0: #{biomedclip_forward.5}
  #allocation0 [shape = 'u32[]', space=smem, size = 0x4, offset = 0x4, fixed_abs, tag = 'smem constant byte address 0x4 - core index']
  #allocation1 [shape = 'u32[144,128]{1,0:T(1,128)}', space=vmem, size = 0x12000, scoped, tag = 'internal scratch']
  %s0 = inlined_call_operand.vmem [shape: bf16[2,8,64], index: 0, kind: input, shape index: {}]
  %s1 = inlined_call_operand.vmem [shape: f32[1,64], index: 1, kind: input, shape index: {}]
  %s2 = inlined_call_operand.vmem [shape: f32[1,64], index: 2, kind: input, shape index: {}]
  %s3 = inlined_call_operand.vmem [shape: bf16[64,192], index: 3, kind: input, shape index: {}]
  %s4 = inlined_call_operand.vmem [shape: f32[1,192], index: 4, kind: input, shape index: {}]
  %s5 = inlined_call_operand.vmem [shape: bf16[64,64], index: 5, kind: input, shape index: {}]
  %s6 = inlined_call_operand.vmem [shape: f32[1,64], index: 6, kind: input, shape index: {}]
  %s7 = inlined_call_operand.vmem [shape: f32[1,64], index: 7, kind: input, shape index: {}]
  %s8 = inlined_call_operand.vmem [shape: f32[1,64], index: 8, kind: input, shape index: {}]
  %s9 = inlined_call_operand.vmem [shape: bf16[64,256], index: 9, kind: input, shape index: {}]
  %s10 = inlined_call_operand.vmem [shape: f32[1,256], index: 10, kind: input, shape index: {}]
  %s11 = inlined_call_operand.vmem [shape: bf16[256,64], index: 11, kind: input, shape index: {}]
  %s12 = inlined_call_operand.vmem [shape: f32[1,64], index: 12, kind: input, shape index: {}]
  %s13 = inlined_call_operand.vmem [shape: bf16[2,8,64], index: 13, kind: output, shape index: {}]
  %s14 = sld [smem:[#allocation0]]
  $region85: #{biomedclip_forward.5} parent=0
    _
  %s16 = ssub.s32 1, %s14
  %s17 = scalar_select 0, %s16, %s14
  loop: start=0, step=1, limit=4
  $region2: #{biomedclip_forward.5} parent=0 // loop_pre_header
    _
  $region3: #{biomedclip_forward.5} parent=0 // loop_header
    %s19 = sphi 0, %s23
    %p20 = scmp.ge.s32.totalorder %s19, 4
    %s29 = sphi 0, %s31
    %s32 = sphi 0, %s29
    %s33 = sphi 0, %s32
    %s49 = sphi 0, %s33
    %s53 = sphi 0, %s53
    %s55 = sphi 0, %s53
    %s56 = sphi 0, %s55
    %s70 = sphi 0, %s56
    %s74 = sphi 0, %s74
    %s76 = sphi 0, %s74
    %s77 = sphi 0, %s76
    %s91 = sphi 0, %s77
    %s95 = sphi 0, %s95
    %s97 = sphi 0, %s95
    %s98 = sphi 0, %s97
    %s112 = sphi 0, %s98
    %s116 = sphi 0, %s116
    %s118 = sphi 0, %s116
    %s119 = sphi 0, %s118
    %s133 = sphi 0, %s119
    %s137 = sphi 0, %s137
    %s139 = sphi 0, %s137
    %s140 = sphi 0, %s139
    %s154 = sphi 0, %s140
    %s158 = sphi 0, %s158
    %s160 = sphi 0, %s158
    %s161 = sphi 0, %s160
    %s175 = sphi 0, %s161
    %s179 = sphi 0, %s179
    %s181 = sphi 0, %s179
    %s182 = sphi 0, %s181
    %s196 = sphi 0, %s182
    %s200 = sphi 0, %s200
    %s202 = sphi 0, %s200
    %s203 = sphi 0, %s202
    %s217 = sphi 0, %s203
    %s221 = sphi 0, %s221
    %s223 = sphi 0, %s221
    %s224 = sphi 0, %s223
    %s238 = sphi 0, %s224
    %s242 = sphi 0, %s242
    %s244 = sphi 0, %s242
    %s245 = sphi 0, %s244
    %s259 = sphi 0, %s245
    %s263 = sphi 0, %s263
    %s265 = sphi 0, %s263
    %s266 = sphi 0, %s265
    %s280 = sphi 0, %s266
    %s284 = sphi 0, %s284
    %s286 = sphi 0, %s284
    %s287 = sphi 0, %s286
    %s301 = sphi 0, %s287
    %s307 = sphi 0, %s309
    %s310 = sphi 0, %s307
    %s311 = sphi 0, %s310
    %s327 = sphi 0, %s311
  $region4: #{biomedclip_forward.5} parent=0 // loop_header_branch
    %22 = sbr.rel (%p20) target = $region8
  $region5: #{biomedclip_forward.5} parent=0 // loop_body
    %s24 = ssub.s32 %s19, 1
    %s25 = ssub.s32 %s19, 2
    %s26 = sadd.s32 %s19, 1
    %s27 = ssub.s32 %s19, %s26
    %p28 = scmp.eq.s32.totalorder %s27, 0
    %s30 = sadd.s32 %s29, 1
    %s31 = scalar_select %p28, %s29, %s30
    %p34 = pneg %p28
    %p35 = scmp.eq.s32.totalorder %s19, 1
    %p36 = por %p34, %p35
    %p37 = scmp.ne.s32.totalorder %s29, %s32
    %p38 = scmp.eq.s32.totalorder %s19, 0
    %p39 = por %p37, %p38
    %p40 = scmp.ne.s32.totalorder %s29, %s32
    %p41 = scmp.eq.s32.totalorder %s24, 1
    %p42 = por %p40, %p41
    %p43 = scmp.ne.s32.totalorder %s32, %s33
    %p44 = scmp.eq.s32.totalorder %s24, 0
    %p45 = por %p43, %p44
    %p46 = scmp.ne.s32.totalorder %s32, %s33
    %p47 = scmp.eq.s32.totalorder %s25, 1
    %p48 = por %p46, %p47
    %p50 = scmp.ne.s32.totalorder %s33, %s49
    %p51 = scmp.eq.s32.totalorder %s25, 0
    %p52 = por %p50, %p51
    %s54 = sadd.s32 %s53, 1
    %p57 = scmp.eq.s32.totalorder %s19, 1
    %p58 = scmp.ne.s32.totalorder %s53, %s55
    %p59 = scmp.eq.s32.totalorder %s19, 0
    %p60 = por %p58, %p59
    %p61 = scmp.ne.s32.totalorder %s53, %s55
    %p62 = scmp.eq.s32.totalorder %s24, 1
    %p63 = por %p61, %p62
    %p64 = scmp.ne.s32.totalorder %s55, %s56
    %p65 = scmp.eq.s32.totalorder %s24, 0
    %p66 = por %p64, %p65
    %p67 = scmp.ne.s32.totalorder %s55, %s56
    %p68 = scmp.eq.s32.totalorder %s25, 1
    %p69 = por %p67, %p68
    %p71 = scmp.ne.s32.totalorder %s56, %s70
    %p72 = scmp.eq.s32.totalorder %s25, 0
    %p73 = por %p71, %p72
    %s75 = sadd.s32 %s74, 1
    %p78 = scmp.eq.s32.totalorder %s19, 1
    %p79 = scmp.ne.s32.totalorder %s74, %s76
    %p80 = scmp.eq.s32.totalorder %s19, 0
    %p81 = por %p79, %p80
    %p82 = scmp.ne.s32.totalorder %s74, %s76
    %p83 = scmp.eq.s32.totalorder %s24, 1
    %p84 = por %p82, %p83
    %p85 = scmp.ne.s32.totalorder %s76, %s77
    %p86 = scmp.eq.s32.totalorder %s24, 0
    %p87 = por %p85, %p86
    %p88 = scmp.ne.s32.totalorder %s76, %s77
    %p89 = scmp.eq.s32.totalorder %s25, 1
    %p90 = por %p88, %p89
    %p92 = scmp.ne.s32.totalorder %s77, %s91
    %p93 = scmp.eq.s32.totalorder %s25, 0
    %p94 = por %p92, %p93
    %s96 = sadd.s32 %s95, 1
    %p99 = scmp.eq.s32.totalorder %s19, 1
    %p100 = scmp.ne.s32.totalorder %s95, %s97
    %p101 = scmp.eq.s32.totalorder %s19, 0
    %p102 = por %p100, %p101
    %p103 = scmp.ne.s32.totalorder %s95, %s97
    %p104 = scmp.eq.s32.totalorder %s24, 1
    %p105 = por %p103, %p104
    %p106 = scmp.ne.s32.totalorder %s97, %s98
    %p107 = scmp.eq.s32.totalorder %s24, 0
    %p108 = por %p106, %p107
    %p109 = scmp.ne.s32.totalorder %s97, %s98
    %p110 = scmp.eq.s32.totalorder %s25, 1
    %p111 = por %p109, %p110
    %p113 = scmp.ne.s32.totalorder %s98, %s112
    %p114 = scmp.eq.s32.totalorder %s25, 0
    %p115 = por %p113, %p114
    %s117 = sadd.s32 %s116, 1
    %p120 = scmp.eq.s32.totalorder %s19, 1
    %p121 = scmp.ne.s32.totalorder %s116, %s118
    %p122 = scmp.eq.s32.totalorder %s19, 0
    %p123 = por %p121, %p122
    %p124 = scmp.ne.s32.totalorder %s116, %s118
    %p125 = scmp.eq.s32.totalorder %s24, 1
    %p126 = por %p124, %p125
    %p127 = scmp.ne.s32.totalorder %s118, %s119
    %p128 = scmp.eq.s32.totalorder %s24, 0
    %p129 = por %p127, %p128
    %p130 = scmp.ne.s32.totalorder %s118, %s119
    %p131 = scmp.eq.s32.totalorder %s25, 1
    %p132 = por %p130, %p131
    %p134 = scmp.ne.s32.totalorder %s119, %s133
    %p135 = scmp.eq.s32.totalorder %s25, 0
    %p136 = por %p134, %p135
    %s138 = sadd.s32 %s137, 1
    %p141 = scmp.eq.s32.totalorder %s19, 1
    %p142 = scmp.ne.s32.totalorder %s137, %s139
    %p143 = scmp.eq.s32.totalorder %s19, 0
    %p144 = por %p142, %p143
    %p145 = scmp.ne.s32.totalorder %s137, %s139
    %p146 = scmp.eq.s32.totalorder %s24, 1
    %p147 = por %p145, %p146
    %p148 = scmp.ne.s32.totalorder %s139, %s140
    %p149 = scmp.eq.s32.totalorder %s24, 0
    %p150 = por %p148, %p149
    %p151 = scmp.ne.s32.totalorder %s139, %s140
    %p152 = scmp.eq.s32.totalorder %s25, 1
    %p153 = por %p151, %p152
    %p155 = scmp.ne.s32.totalorder %s140, %s154
    %p156 = scmp.eq.s32.totalorder %s25, 0
    %p157 = por %p155, %p156
    %s159 = sadd.s32 %s158, 1
    %p162 = scmp.eq.s32.totalorder %s19, 1
    %p163 = scmp.ne.s32.totalorder %s158, %s160
    %p164 = scmp.eq.s32.totalorder %s19, 0
    %p165 = por %p163, %p164
    %p166 = scmp.ne.s32.totalorder %s158, %s160
    %p167 = scmp.eq.s32.totalorder %s24, 1
    %p168 = por %p166, %p167
    %p169 = scmp.ne.s32.totalorder %s160, %s161
    %p170 = scmp.eq.s32.totalorder %s24, 0
    %p171 = por %p169, %p170
    %p172 = scmp.ne.s32.totalorder %s160, %s161
    %p173 = scmp.eq.s32.totalorder %s25, 1
    %p174 = por %p172, %p173
    %p176 = scmp.ne.s32.totalorder %s161, %s175
    %p177 = scmp.eq.s32.totalorder %s25, 0
    %p178 = por %p176, %p177
    %s180 = sadd.s32 %s179, 1
    %p183 = scmp.eq.s32.totalorder %s19, 1
    %p184 = scmp.ne.s32.totalorder %s179, %s181
    %p185 = scmp.eq.s32.totalorder %s19, 0
    %p186 = por %p184, %p185
    %p187 = scmp.ne.s32.totalorder %s179, %s181
    %p188 = scmp.eq.s32.totalorder %s24, 1
    %p189 = por %p187, %p188
    %p190 = scmp.ne.s32.totalorder %s181, %s182
    %p191 = scmp.eq.s32.totalorder %s24, 0
    %p192 = por %p190, %p191
    %p193 = scmp.ne.s32.totalorder %s181, %s182
    %p194 = scmp.eq.s32.totalorder %s25, 1
    %p195 = por %p193, %p194
    %p197 = scmp.ne.s32.totalorder %s182, %s196
    %p198 = scmp.eq.s32.totalorder %s25, 0
    %p199 = por %p197, %p198
    %s201 = sadd.s32 %s200, 1
    %p204 = scmp.eq.s32.totalorder %s19, 1
    %p205 = scmp.ne.s32.totalorder %s200, %s202
    %p206 = scmp.eq.s32.totalorder %s19, 0
    %p207 = por %p205, %p206
    %p208 = scmp.ne.s32.totalorder %s200, %s202
    %p209 = scmp.eq.s32.totalorder %s24, 1
    %p210 = por %p208, %p209
    %p211 = scmp.ne.s32.totalorder %s202, %s203
    %p212 = scmp.eq.s32.totalorder %s24, 0
    %p213 = por %p211, %p212
    %p214 = scmp.ne.s32.totalorder %s202, %s203
    %p215 = scmp.eq.s32.totalorder %s25, 1
    %p216 = por %p214, %p215
    %p218 = scmp.ne.s32.totalorder %s203, %s217
    %p219 = scmp.eq.s32.totalorder %s25, 0
    %p220 = por %p218, %p219
    %s222 = sadd.s32 %s221, 1
    %p225 = scmp.eq.s32.totalorder %s19, 1
    %p226 = scmp.ne.s32.totalorder %s221, %s223
    %p227 = scmp.eq.s32.totalorder %s19, 0
    %p228 = por %p226, %p227
    %p229 = scmp.ne.s32.totalorder %s221, %s223
    %p230 = scmp.eq.s32.totalorder %s24, 1
    %p231 = por %p229, %p230
    %p232 = scmp.ne.s32.totalorder %s223, %s224
    %p233 = scmp.eq.s32.totalorder %s24, 0
    %p234 = por %p232, %p233
    %p235 = scmp.ne.s32.totalorder %s223, %s224
    %p236 = scmp.eq.s32.totalorder %s25, 1
    %p237 = por %p235, %p236
    %p239 = scmp.ne.s32.totalorder %s224, %s238
    %p240 = scmp.eq.s32.totalorder %s25, 0
    %p241 = por %p239, %p240
    %s243 = sadd.s32 %s242, 1
    %p246 = scmp.eq.s32.totalorder %s19, 1
    %p247 = scmp.ne.s32.totalorder %s242, %s244
    %p248 = scmp.eq.s32.totalorder %s19, 0
    %p249 = por %p247, %p248
    %p250 = scmp.ne.s32.totalorder %s242, %s244
    %p251 = scmp.eq.s32.totalorder %s24, 1
    %p252 = por %p250, %p251
    %p253 = scmp.ne.s32.totalorder %s244, %s245
    %p254 = scmp.eq.s32.totalorder %s24, 0
    %p255 = por %p253, %p254
    %p256 = scmp.ne.s32.totalorder %s244, %s245
    %p257 = scmp.eq.s32.totalorder %s25, 1
    %p258 = por %p256, %p257
    %p260 = scmp.ne.s32.totalorder %s245, %s259
    %p261 = scmp.eq.s32.totalorder %s25, 0
    %p262 = por %p260, %p261
    %s264 = sadd.s32 %s263, 1
    %p267 = scmp.eq.s32.totalorder %s19, 1
    %p268 = scmp.ne.s32.totalorder %s263, %s265
    %p269 = scmp.eq.s32.totalorder %s19, 0
    %p270 = por %p268, %p269
    %p271 = scmp.ne.s32.totalorder %s263, %s265
    %p272 = scmp.eq.s32.totalorder %s24, 1
    %p273 = por %p271, %p272
    %p274 = scmp.ne.s32.totalorder %s265, %s266
    %p275 = scmp.eq.s32.totalorder %s24, 0
    %p276 = por %p274, %p275
    %p277 = scmp.ne.s32.totalorder %s265, %s266
    %p278 = scmp.eq.s32.totalorder %s25, 1
    %p279 = por %p277, %p278
    %p281 = scmp.ne.s32.totalorder %s266, %s280
    %p282 = scmp.eq.s32.totalorder %s25, 0
    %p283 = por %p281, %p282
    %s285 = sadd.s32 %s284, 1
    %p288 = scmp.eq.s32.totalorder %s19, 1
    %p289 = scmp.ne.s32.totalorder %s284, %s286
    %p290 = scmp.eq.s32.totalorder %s19, 0
    %p291 = por %p289, %p290
    %p292 = scmp.ne.s32.totalorder %s284, %s286
    %p293 = scmp.eq.s32.totalorder %s24, 1
    %p294 = por %p292, %p293
    %p295 = scmp.ne.s32.totalorder %s286, %s287
    %p296 = scmp.eq.s32.totalorder %s24, 0
    %p297 = por %p295, %p296
    %p298 = scmp.ne.s32.totalorder %s286, %s287
    %p299 = scmp.eq.s32.totalorder %s25, 1
    %p300 = por %p298, %p299
    %p302 = scmp.ne.s32.totalorder %s287, %s301
    %p303 = scmp.eq.s32.totalorder %s25, 0
    %p304 = por %p302, %p303
    %s305 = ssub.s32 %s19, %s26
    %p306 = scmp.eq.s32.totalorder %s305, 0
    %s308 = sadd.s32 %s307, 1
    %s309 = scalar_select %p306, %s307, %s308
    %p312 = pneg %p306
    %p313 = scmp.eq.s32.totalorder %s19, 1
    %p314 = por %p312, %p313
    %p315 = scmp.ne.s32.totalorder %s307, %s310
    %p316 = scmp.eq.s32.totalorder %s19, 0
    %p317 = por %p315, %p316
    %p318 = scmp.ne.s32.totalorder %s307, %s310
    %p319 = scmp.eq.s32.totalorder %s24, 1
    %p320 = por %p318, %p319
    %p321 = scmp.ne.s32.totalorder %s310, %s311
    %p322 = scmp.eq.s32.totalorder %s24, 0
    %p323 = por %p321, %p322
    %p324 = scmp.ne.s32.totalorder %s310, %s311
    %p325 = scmp.eq.s32.totalorder %s25, 1
    %p326 = por %p324, %p325
    %p328 = scmp.ne.s32.totalorder %s311, %s327
    %p329 = scmp.eq.s32.totalorder %s25, 0
    %p330 = por %p328, %p329
    %p331 = scmp.le.s32.totalorder 1, %s19
    %p332 = scmp.lt.s32.totalorder %s19, 3
    %p333 = pnand %p331, %p332
    %p334 = pneg %p333
    // Predicated region
    $region9: #{biomedclip_forward.5} parent=5 // pred_check
      _
    $region10: #{biomedclip_forward.5} parent=5 // pred_check_branch
      %336 = sbr.rel (%p333) target = $region12
    $region11: #{biomedclip_forward.5} parent=5 // pred_region
      %s337 = ssub.s32 %s19, 1
      // Predicated region
      $region13: #{biomedclip_forward.5} parent=11 // pred_check
        %p338 = pneg %p66
      $region14: #{biomedclip_forward.5} parent=11 // pred_check_branch
        %340 = sbr.rel (%p338) target = $region16
      $region15: #{biomedclip_forward.5} parent=11 // pred_region
        _
      $region16: #{biomedclip_forward.5} parent=11 // pred_fallthru
        _
      // Predicated region
      $region17: #{biomedclip_forward.5} parent=11 // pred_check
        %p341 = pneg %p87
      $region18: #{biomedclip_forward.5} parent=11 // pred_check_branch
        %343 = sbr.rel (%p341) target = $region20
      $region19: #{biomedclip_forward.5} parent=11 // pred_region
        _
      $region20: #{biomedclip_forward.5} parent=11 // pred_fallthru
        _
      // Predicated region
      $region21: #{biomedclip_forward.5} parent=11 // pred_check
        %p344 = pneg %p108
      $region22: #{biomedclip_forward.5} parent=11 // pred_check_branch
        %346 = sbr.rel (%p344) target = $region24
      $region23: #{biomedclip_forward.5} parent=11 // pred_region
        _
      $region24: #{biomedclip_forward.5} parent=11 // pred_fallthru
        _
      // Predicated region
      $region25: #{biomedclip_forward.5} parent=11 // pred_check
        %p347 = pneg %p129
      $region26: #{biomedclip_forward.5} parent=11 // pred_check_branch
        %349 = sbr.rel (%p347) target = $region28
      $region27: #{biomedclip_forward.5} parent=11 // pred_region
        _
      $region28: #{biomedclip_forward.5} parent=11 // pred_fallthru
        _
      // Predicated region
      $region29: #{biomedclip_forward.5} parent=11 // pred_check
        %p350 = pneg %p150
      $region30: #{biomedclip_forward.5} parent=11 // pred_check_branch
        %352 = sbr.rel (%p350) target = $region32
      $region31: #{biomedclip_forward.5} parent=11 // pred_region
        _
      $region32: #{biomedclip_forward.5} parent=11 // pred_fallthru
        _
      // Predicated region
      $region33: #{biomedclip_forward.5} parent=11 // pred_check
        %p353 = pneg %p171
      $region34: #{biomedclip_forward.5} parent=11 // pred_check_branch
        %355 = sbr.rel (%p353) target = $region36
      $region35: #{biomedclip_forward.5} parent=11 // pred_region
        _
      $region36: #{biomedclip_forward.5} parent=11 // pred_fallthru
        _
      // Predicated region
      $region37: #{biomedclip_forward.5} parent=11 // pred_check
        %p356 = pneg %p192
      $region38: #{biomedclip_forward.5} parent=11 // pred_check_branch
        %358 = sbr.rel (%p356) target = $region40
      $region39: #{biomedclip_forward.5} parent=11 // pred_region
        _
      $region40: #{biomedclip_forward.5} parent=11 // pred_fallthru
        _
      // Predicated region
      $region41: #{biomedclip_forward.5} parent=11 // pred_check
        %p359 = pneg %p213
      $region42: #{biomedclip_forward.5} parent=11 // pred_check_branch
        %361 = sbr.rel (%p359) target = $region44
      $region43: #{biomedclip_forward.5} parent=11 // pred_region
        _
      $region44: #{biomedclip_forward.5} parent=11 // pred_fallthru
        _
      // Predicated region
      $region45: #{biomedclip_forward.5} parent=11 // pred_check
        %p362 = pneg %p234
      $region46: #{biomedclip_forward.5} parent=11 // pred_check_branch
        %364 = sbr.rel (%p362) target = $region48
      $region47: #{biomedclip_forward.5} parent=11 // pred_region
        _
      $region48: #{biomedclip_forward.5} parent=11 // pred_fallthru
        _
      // Predicated region
      $region49: #{biomedclip_forward.5} parent=11 // pred_check
        %p365 = pneg %p255
      $region50: #{biomedclip_forward.5} parent=11 // pred_check_branch
        %367 = sbr.rel (%p365) target = $region52
      $region51: #{biomedclip_forward.5} parent=11 // pred_region
        _
      $region52: #{biomedclip_forward.5} parent=11 // pred_fallthru
        _
      // Predicated region
      $region53: #{biomedclip_forward.5} parent=11 // pred_check
        %p368 = pneg %p276
      $region54: #{biomedclip_forward.5} parent=11 // pred_check_branch
        %370 = sbr.rel (%p368) target = $region56
      $region55: #{biomedclip_forward.5} parent=11 // pred_region
        _
      $region56: #{biomedclip_forward.5} parent=11 // pred_fallthru
        _
      // Predicated region
      $region57: #{biomedclip_forward.5} parent=11 // pred_check
        %p371 = pneg %p297
      $region58: #{biomedclip_forward.5} parent=11 // pred_check_branch
        %373 = sbr.rel (%p371) target = $region60
      $region59: #{biomedclip_forward.5} parent=11 // pred_region
        _
      $region60: #{biomedclip_forward.5} parent=11 // pred_fallthru
        _
    $region12: #{biomedclip_forward.5} parent=5 // pred_fallthru
      _
    %p374 = scmp.lt.s32.totalorder %s19, 2
    // Predicated region
    $region61: #{biomedclip_forward.5} parent=5 // pred_check
      %p375 = pneg %p374
    $region62: #{biomedclip_forward.5} parent=5 // pred_check_branch
      %377 = sbr.rel (%p375) target = $region64
    $region63: #{biomedclip_forward.5} parent=5 // pred_region
      // Predicated region
      $region65: #{biomedclip_forward.5} parent=63 // pred_check
        %p378 = pneg %p39
      $region66: #{biomedclip_forward.5} parent=63 // pred_check_branch
        %380 = sbr.rel (%p378) target = $region68
      $region67: #{biomedclip_forward.5} parent=63 // pred_region
        %p381 = scmp.lt.s32.totalorder %s19, 1
        %s382 = scalar_select %p381, %s19, 1
        %s383 = smul.addr %s382, 4
        %s384 = scalar_lea.vmem %s0, %s383
      $region68: #{biomedclip_forward.5} parent=63 // pred_fallthru
        _
    $region64: #{biomedclip_forward.5} parent=5 // pred_fallthru
      _
    %p385 = scmp.le.s32.totalorder 1, %s19
    %p386 = scmp.lt.s32.totalorder %s19, 3
    %p387 = pnand %p385, %p386
    %p388 = pneg %p387
    // Predicated region
    $region69: #{biomedclip_forward.5} parent=5 // pred_check
      _
    $region70: #{biomedclip_forward.5} parent=5 // pred_check_branch
      %390 = sbr.rel (%p387) target = $region72
    $region71: #{biomedclip_forward.5} parent=5 // pred_region
      %s391 = ssub.s32 %s19, 1
      %p392 = scmp.lt.s32.totalorder %s24, 1
      %s393 = scalar_select %p392, %s24, 1
      %s394 = smul.addr %s393, 4
      %s395 = scalar_lea.vmem %s0, %s394
      %p396 = pneg %p45
      %p397 = pneg %p42
      %p398 = pneg %p66
      %p399 = pneg %p63
      %p400 = pneg %p87
      %p401 = pneg %p84
      %p402 = pneg %p108
      %p403 = pneg %p105
      %p404 = pneg %p129
      %p405 = pneg %p126
      %p406 = pneg %p150
      %p407 = pneg %p147
      %p408 = pneg %p171
      %p409 = pneg %p168
      %p410 = pneg %p192
      %p411 = pneg %p189
      %p412 = pneg %p213
      %p413 = pneg %p210
      %p414 = pneg %p234
      %p415 = pneg %p231
      %p416 = pneg %p255
      %p417 = pneg %p252
      %p418 = pneg %p276
      %p419 = pneg %p273
      %p420 = pneg %p297
      %p421 = pneg %p294
      %p422 = pneg %p323
      %p423 = pneg %p320
      %p424 = scmp.lt.s32.totalorder %s24, 1
      %s425 = scalar_select %p424, %s24, 1
      %s426 = smul.addr %s425, 4
      %s427 = scalar_lea.vmem %s13, %s426
      %p428 = scmp.lt.s32.totalorder %s24, 1
      %s429 = scalar_select %p428, %s24, 1
      %s430 = smul.addr %s429, 4
      %s431 = scalar_lea.vmem %s0, %s430
      %p432 = scmp.lt.s32.totalorder %s24, 1
      %s433 = scalar_select %p432, %s24, 1
      %s434 = smul.addr %s433, 4
      %s435 = scalar_lea.vmem %s13, %s434
      %v437 = vld [vmem:[%s431] sm:$0xf]
      %v438 = vunpack.c.l.bf16 %v437
      %v439 = vld [vmem:[%s1] sm:$0x1]
      %v440 = vld [vmem:[%s2] sm:$0x1]
      %vm441 = vcmask 523264
      %v442 = vsel %vm441, %v438, 0.0
      %443 = vadd.xlane.f32.xlu0 %v442
      %v444 = vpop.xlane.xlu0 %443
      %v445 = vrcp.pop 64.0
      %v446 = vmul.f32 %v444, %v445
      %v447 = vsub.f32 %v438, %v446
      %v448 = vmul.f32 %v447, %v447
      %v449 = vsel %vm441, %v448, 0.0
      %450 = vadd.xlane.f32.xlu0 %v449
      %v451 = vpop.xlane.xlu0 %450
      %v452 = vmul.f32 %v451, %v445
      %v453 = vadd.f32 %v452, 1e-06
      %v454 = vrsqrt.pop %v453
      %v455 = vmul.f32 %v447, %v454
      %v457 = vlaneseq
      %v458 = vshrl.u32 %v457, 7
      %v459 = vsub.s32 0, %v458
      %v460 = vrot.slane %v439, %v459
      %v462 = vmul.f32 %v455, %v460
      %v464 = vlaneseq
      %v465 = vshrl.u32 %v464, 7
      %v466 = vsub.s32 0, %v465
      %v467 = vrot.slane %v440, %v466
      %v469 = vadd.f32 %v462, %v467
      %v470 = vpack.c.bf16 %v469, %v469
      %v471 = vld [vmem:[%s3] sm:$0xff]
      %v472 = vld [vmem:[%s3 + $0x8] sm:$0xff]
      %v473 = vld [vmem:[%s3 + $0x10] sm:$0xff]
      %v474 = vld [vmem:[%s3 + $0x18] sm:$0xff]
      %v475 = vld [vmem:[%s3 + $0x20] sm:$0xff]
      %v476 = vld [vmem:[%s3 + $0x28] sm:$0xff]
      %v477 = vld [vmem:[%s3 + $0x30] sm:$0xff]
      %v478 = vld [vmem:[%s3 + $0x38] sm:$0xff]
      %v479 = vld [vmem:[%s4] sm:$0x3]
      %v481 = vlaneseq
      %v482 = vshrl.u32 %v481, 7
      %v483 = vsub.s32 0, %v482
      %v484 = vrot.slane %v479, %v483
      %v485 = vlaneseq
      %v486 = vshrl.u32 %v485, 7
      %v487 = vsub.s32 1, %v486
      %v488 = vrot.slane %v479, %v487
      %v499 = vunpack.c.l.b16 %v471
      %v500 = vunpack.c.h.b16 %v471
      %v501 = vunpack.c.l.b16 %v472
      %v502 = vunpack.c.h.b16 %v472
      %v503 = vunpack.c.l.b16 %v473
      %v504 = vunpack.c.h.b16 %v473
      %v505 = vunpack.c.l.b16 %v474
      %v506 = vunpack.c.h.b16 %v474
      %v507 = vunpack.c.l.b16 %v475
      %v508 = vunpack.c.h.b16 %v475
      %v509 = vunpack.c.l.b16 %v476
      %v510 = vunpack.c.h.b16 %v476
      %v511 = vunpack.c.l.b16 %v477
      %v512 = vunpack.c.h.b16 %v477
      %v513 = vunpack.c.l.b16 %v478
      %v514 = vunpack.c.h.b16 %v478
      %v515 = vpack.c.b16 %v501, %v499
      %v516 = vpack.c.b16 %v502, %v500
      %v517 = vpack.c.b16 %v505, %v503
      %v518 = vpack.c.b16 %v506, %v504
      %v519 = vpack.c.b16 %v509, %v507
      %v520 = vpack.c.b16 %v510, %v508
      %v521 = vpack.c.b16 %v513, %v511
      %v522 = vpack.c.b16 %v514, %v512
      %v532 = vsel %vm441, %v470, 0
      %534 = vmatprep.subr.bf16.mxu0 %v516
      %535 = vmatpush1.bf16.msra.mxu0 %v515
      %536 = vmatprep.subr.bf16.mxu0 %v518
      %537 = vmatpush1.bf16.msra.mxu0 %v517
      %538 = vmatprep.subr.bf16.mxu0 %v520
      %539 = vmatpush1.bf16.msra.mxu0 %v519
      %540 = vmatprep.subr.bf16.mxu0 %v522
      %541 = vmatpush1.bf16.msra.mxu0 %v521
      %542 = vmatprep.subr.bf16.mxu0 0
      %543 = vmatpush1.bf16.msra.mxu0 0
      %544 = vmatprep.subr.bf16.mxu0 0
      %545 = vmatpush1.bf16.msra.mxu0 0
      %546 = vmatprep.subr.bf16.mxu0 0
      %547 = vmatpush1.bf16.msra.mxu0 0
      %548 = vmatprep.subr.bf16.mxu0 0
      %549 = vmatpush1.bf16.msra.mxu0 0
      %550 = vmatprep.subr.bf16.mxu0 0
      %551 = vmatpush1.bf16.msra.mxu0 0
      %552 = vmatprep.subr.bf16.mxu0 0
      %553 = vmatpush1.bf16.msra.mxu0 0
      %554 = vmatprep.subr.bf16.mxu0 0
      %555 = vmatpush1.bf16.msra.mxu0 0
      %556 = vmatprep.subr.bf16.mxu0 0
      %557 = vmatpush1.bf16.msra.mxu0 0
      %558 = vmatprep.subr.bf16.mxu0 0
      %559 = vmatpush1.bf16.msra.mxu0 0
      %560 = vmatprep.subr.bf16.mxu0 0
      %561 = vmatpush1.bf16.msra.mxu0 0
      %562 = vmatprep.subr.bf16.mxu0 0
      %563 = vmatpush1.bf16.msra.mxu0 0
      %564 = vmatprep.subr.bf16.mxu0 0
      %565 = vmatpush1.bf16.msra.mxu0 0
      %566 = vmatprep.mubr.bf16.mxu0 0
      %567 = vmatmul.mubr.bf16.gmra.mrb[0].mxu0 %v532
      %v568 = vpop.f32.mrb[0].mxu0
      %v569 = vadd.f32 %v484, %v568
      %v570 = vpop.f32.mrb[0].mxu0
      %v571 = vadd.f32 %v488, %v570
      %v572 = vpop.f32.mrb[0].mxu0
      %v573 = vpop.f32.mrb[0].mxu0
      %574 = vdwg.mxu0
      %v575 = vlaneseq
      %v576 = vand.u32 %v575, 127
      %vm577 = vcmp.lt.s32.totalorder %v576, 5
      %v578 = vpack.c.bf16 %v569, %v569
      %v579 = vpack.c.bf16 %v571, %v571
      %581 = vrot.lane.b32.xlu0 %v578, 64
      %v582 = vpop.permute.xlu0 %581
      %vm583 = vcmask 130048
      %v585 = vsel %vm583, %v578, 0
      %v588 = vsel %vm583, %v582, 0
      %590 = vmatprep.subr.bf16.mxu0 0
      %591 = vmatpush1.bf16.xpose.msra.mxu0 %v588
      %592 = vmatprep.subr.bf16.mxu0 0
      %593 = vmatpush1.bf16.xpose.msra.mxu0 0
      %594 = vmatprep.subr.bf16.mxu0 0
      %595 = vmatpush1.bf16.xpose.msra.mxu0 0
      %596 = vmatprep.subr.bf16.mxu0 0
      %597 = vmatpush1.bf16.xpose.msra.mxu0 0
      %598 = vmatprep.subr.bf16.mxu0 0
      %599 = vmatpush1.bf16.xpose.msra.mxu0 0
      %600 = vmatprep.subr.bf16.mxu0 0
      %601 = vmatpush1.bf16.xpose.msra.mxu0 0
      %602 = vmatprep.subr.bf16.mxu0 0
      %603 = vmatpush1.bf16.xpose.msra.mxu0 0
      %604 = vmatprep.subr.bf16.mxu0 0
      %605 = vmatpush1.bf16.xpose.msra.mxu0 0
      %606 = vmatprep.subr.bf16.mxu0 0
      %607 = vmatpush1.bf16.xpose.msra.mxu0 0
      %608 = vmatprep.subr.bf16.mxu0 0
      %609 = vmatpush1.bf16.xpose.msra.mxu0 0
      %610 = vmatprep.subr.bf16.mxu0 0
      %611 = vmatpush1.bf16.xpose.msra.mxu0 0
      %612 = vmatprep.subr.bf16.mxu0 0
      %613 = vmatpush1.bf16.xpose.msra.mxu0 0
      %614 = vmatprep.subr.bf16.mxu0 0
      %615 = vmatpush1.bf16.xpose.msra.mxu0 0
      %616 = vmatprep.subr.bf16.mxu0 0
      %617 = vmatpush1.bf16.xpose.msra.mxu0 0
      %618 = vmatprep.subr.bf16.mxu0 0
      %619 = vmatpush1.bf16.xpose.msra.mxu0 0
      %620 = vmatprep.subr.bf16.mxu0 0
      %621 = vmatpush1.bf16.xpose.msra.mxu0 0
      %622 = vmatprep.mubr.bf16.mxu0 0
      %623 = vmatmul.mubr.bf16.gmra.mrb[0].mxu0 %v585
      %v624 = vpop.f32.mrb[0].mxu0
      %v625 = vadd.f32 0.0, %v624
      %v626 = vpop.f32.mrb[0].mxu0
      %v627 = vpop.f32.mrb[0].mxu0
      %v628 = vpop.f32.mrb[0].mxu0
      %629 = vdwg.mxu0
      %v630 = vmul.f32 %v625, 0.25
      %v631 = vsel %vm577, %v630, -1e+30
      %vm632 = vcmask 64512
      %v633 = vsel %vm632, %v631, -inf
      %634 = vmax.xlane.f32.xlu0 %v633
      %v635 = vpop.xlane.xlu0 %634
      %v636 = vsub.f32 %v631, %v635
      %v637 = vmul.f32 %v636, 1.442695
      %v638 = vpow.pop %v637
      %v639 = vsel %vm632, %v638, 0.0
      %640 = vadd.xlane.f32.xlu0 %v639
      %v641 = vpop.xlane.xlu0 %640
      %v642 = vrcp.pop %v641
      %v643 = vmul.f32 %v638, %v642
      %v644 = vpack.c.bf16 %v643, %v643
      %v646 = vsel %vm632, %v644, 0
      %vm648 = vcmask 1043456
      %v650 = vsel %vm648, %v579, 0
      %652 = vmatprep.subr.bf16.mxu0 0
      %653 = vmatpush1.bf16.msra.mxu0 %v650
      %654 = vmatprep.subr.bf16.mxu0 0
      %655 = vmatpush1.bf16.msra.mxu0 0
      %656 = vmatprep.subr.bf16.mxu0 0
      %657 = vmatpush1.bf16.msra.mxu0 0
      %658 = vmatprep.subr.bf16.mxu0 0
      %659 = vmatpush1.bf16.msra.mxu0 0
      %660 = vmatprep.subr.bf16.mxu0 0
      %661 = vmatpush1.bf16.msra.mxu0 0
      %662 = vmatprep.subr.bf16.mxu0 0
      %663 = vmatpush1.bf16.msra.mxu0 0
      %664 = vmatprep.subr.bf16.mxu0 0
      %665 = vmatpush1.bf16.msra.mxu0 0
      %666 = vmatprep.subr.bf16.mxu0 0
      %667 = vmatpush1.bf16.msra.mxu0 0
      %668 = vmatprep.subr.bf16.mxu0 0
      %669 = vmatpush1.bf16.msra.mxu0 0
      %670 = vmatprep.subr.bf16.mxu0 0
      %671 = vmatpush1.bf16.msra.mxu0 0
      %672 = vmatprep.subr.bf16.mxu0 0
      %673 = vmatpush1.bf16.msra.mxu0 0
      %674 = vmatprep.subr.bf16.mxu0 0
      %675 = vmatpush1.bf16.msra.mxu0 0
      %676 = vmatprep.subr.bf16.mxu0 0
      %677 = vmatpush1.bf16.msra.mxu0 0
      %678 = vmatprep.subr.bf16.mxu0 0
      %679 = vmatpush1.bf16.msra.mxu0 0
      %680 = vmatprep.subr.bf16.mxu0 0
      %681 = vmatpush1.bf16.msra.mxu0 0
      %682 = vmatprep.subr.bf16.mxu0 0
      %683 = vmatpush1.bf16.msra.mxu0 0
      %684 = vmatprep.mubr.bf16.mxu0 0
      %685 = vmatmul.mubr.bf16.gmra.mrb[0].mxu0 %v646
      %v686 = vpop.f32.mrb[0].mxu0
      %v687 = vadd.f32 0.0, %v686
      %v688 = vpop.f32.mrb[0].mxu0
      %v689 = vpop.f32.mrb[0].mxu0
      %v690 = vpop.f32.mrb[0].mxu0
      %691 = vdwg.mxu0
      %692 = vrot.lane.b32.xlu0 %v578, 112
      %v693 = vpop.permute.xlu0 %692
      %694 = vrot.lane.b32.xlu0 %v578, 48
      %v695 = vpop.permute.xlu0 %694
      %v697 = vsel %vm583, %v693, 0
      %v700 = vsel %vm583, %v695, 0
      %702 = vmatprep.subr.bf16.mxu0 0
      %703 = vmatpush1.bf16.xpose.msra.mxu0 %v700
      %704 = vmatprep.subr.bf16.mxu0 0
      %705 = vmatpush1.bf16.xpose.msra.mxu0 0
      %706 = vmatprep.subr.bf16.mxu0 0
      %707 = vmatpush1.bf16.xpose.msra.mxu0 0
      %708 = vmatprep.subr.bf16.mxu0 0
      %709 = vmatpush1.bf16.xpose.msra.mxu0 0
      %710 = vmatprep.subr.bf16.mxu0 0
      %711 = vmatpush1.bf16.xpose.msra.mxu0 0
      %712 = vmatprep.subr.bf16.mxu0 0
      %713 = vmatpush1.bf16.xpose.msra.mxu0 0
      %714 = vmatprep.subr.bf16.mxu0 0
      %715 = vmatpush1.bf16.xpose.msra.mxu0 0
      %716 = vmatprep.subr.bf16.mxu0 0
      %717 = vmatpush1.bf16.xpose.msra.mxu0 0
      %718 = vmatprep.subr.bf16.mxu0 0
      %719 = vmatpush1.bf16.xpose.msra.mxu0 0
      %720 = vmatprep.subr.bf16.mxu0 0
      %721 = vmatpush1.bf16.xpose.msra.mxu0 0
      %722 = vmatprep.subr.bf16.mxu0 0
      %723 = vmatpush1.bf16.xpose.msra.mxu0 0
      %724 = vmatprep.subr.bf16.mxu0 0
      %725 = vmatpush1.bf16.xpose.msra.mxu0 0
      %726 = vmatprep.subr.bf16.mxu0 0
      %727 = vmatpush1.bf16.xpose.msra.mxu0 0
      %728 = vmatprep.subr.bf16.mxu0 0
      %729 = vmatpush1.bf16.xpose.msra.mxu0 0
      %730 = vmatprep.subr.bf16.mxu0 0
      %731 = vmatpush1.bf16.xpose.msra.mxu0 0
      %732 = vmatprep.subr.bf16.mxu0 0
      %733 = vmatpush1.bf16.xpose.msra.mxu0 0
      %734 = vmatprep.mubr.bf16.mxu0 0
      %735 = vmatmul.mubr.bf16.gmra.mrb[0].mxu0 %v697
      %v736 = vpop.f32.mrb[0].mxu0
      %v737 = vadd.f32 0.0, %v736
      %v738 = vpop.f32.mrb[0].mxu0
      %v739 = vpop.f32.mrb[0].mxu0
      %v740 = vpop.f32.mrb[0].mxu0
      %741 = vdwg.mxu0
      %v742 = vmul.f32 %v737, 0.25
      %v743 = vsel %vm577, %v742, -1e+30
      %v744 = vsel %vm632, %v743, -inf
      %745 = vmax.xlane.f32.xlu0 %v744
      %v746 = vpop.xlane.xlu0 %745
      %v747 = vsub.f32 %v743, %v746
      %v748 = vmul.f32 %v747, 1.442695
      %v749 = vpow.pop %v748
      %v750 = vsel %vm632, %v749, 0.0
      %751 = vadd.xlane.f32.xlu0 %v750
      %v752 = vpop.xlane.xlu0 %751
      %v753 = vrcp.pop %v752
      %v754 = vmul.f32 %v749, %v753
      %v755 = vpack.c.bf16 %v754, %v754
      %757 = vrot.lane.b32.xlu0 %v579, 112
      %v758 = vpop.permute.xlu0 %757
      %v760 = vsel %vm632, %v755, 0
      %v763 = vsel %vm648, %v758, 0
      %765 = vmatprep.subr.bf16.mxu0 0
      %766 = vmatpush1.bf16.msra.mxu0 %v763
      %767 = vmatprep.subr.bf16.mxu0 0
      %768 = vmatpush1.bf16.msra.mxu0 0
      %769 = vmatprep.subr.bf16.mxu0 0
      %770 = vmatpush1.bf16.msra.mxu0 0
      %771 = vmatprep.subr.bf16.mxu0 0
      %772 = vmatpush1.bf16.msra.mxu0 0
      %773 = vmatprep.subr.bf16.mxu0 0
      %774 = vmatpush1.bf16.msra.mxu0 0
      %775 = vmatprep.subr.bf16.mxu0 0
      %776 = vmatpush1.bf16.msra.mxu0 0
      %777 = vmatprep.subr.bf16.mxu0 0
      %778 = vmatpush1.bf16.msra.mxu0 0
      %779 = vmatprep.subr.bf16.mxu0 0
      %780 = vmatpush1.bf16.msra.mxu0 0
      %781 = vmatprep.subr.bf16.mxu0 0
      %782 = vmatpush1.bf16.msra.mxu0 0
      %783 = vmatprep.subr.bf16.mxu0 0
      %784 = vmatpush1.bf16.msra.mxu0 0
      %785 = vmatprep.subr.bf16.mxu0 0
      %786 = vmatpush1.bf16.msra.mxu0 0
      %787 = vmatprep.subr.bf16.mxu0 0
      %788 = vmatpush1.bf16.msra.mxu0 0
      %789 = vmatprep.subr.bf16.mxu0 0
      %790 = vmatpush1.bf16.msra.mxu0 0
      %791 = vmatprep.subr.bf16.mxu0 0
      %792 = vmatpush1.bf16.msra.mxu0 0
      %793 = vmatprep.subr.bf16.mxu0 0
      %794 = vmatpush1.bf16.msra.mxu0 0
      %795 = vmatprep.subr.bf16.mxu0 0
      %796 = vmatpush1.bf16.msra.mxu0 0
      %797 = vmatprep.mubr.bf16.mxu0 0
      %798 = vmatmul.mubr.bf16.gmra.mrb[0].mxu0 %v760
      %v799 = vpop.f32.mrb[0].mxu0
      %v800 = vadd.f32 0.0, %v799
      %v801 = vpop.f32.mrb[0].mxu0
      %v802 = vpop.f32.mrb[0].mxu0
      %v803 = vpop.f32.mrb[0].mxu0
      %804 = vdwg.mxu0
      %805 = vrot.lane.b32.xlu0 %v578, 96
      %v806 = vpop.permute.xlu0 %805
      %807 = vrot.lane.b32.xlu0 %v578, 32
      %v808 = vpop.permute.xlu0 %807
      %v810 = vsel %vm583, %v806, 0
      %v813 = vsel %vm583, %v808, 0
      %815 = vmatprep.subr.bf16.mxu0 0
      %816 = vmatpush1.bf16.xpose.msra.mxu0 %v813
      %817 = vmatprep.subr.bf16.mxu0 0
      %818 = vmatpush1.bf16.xpose.msra.mxu0 0
      %819 = vmatprep.subr.bf16.mxu0 0
      %820 = vmatpush1.bf16.xpose.msra.mxu0 0
      %821 = vmatprep.subr.bf16.mxu0 0
      %822 = vmatpush1.bf16.xpose.msra.mxu0 0
      %823 = vmatprep.subr.bf16.mxu0 0
      %824 = vmatpush1.bf16.xpose.msra.mxu0 0
      %825 = vmatprep.subr.bf16.mxu0 0
      %826 = vmatpush1.bf16.xpose.msra.mxu0 0
      %827 = vmatprep.subr.bf16.mxu0 0
      %828 = vmatpush1.bf16.xpose.msra.mxu0 0
      %829 = vmatprep.subr.bf16.mxu0 0
      %830 = vmatpush1.bf16.xpose.msra.mxu0 0
      %831 = vmatprep.subr.bf16.mxu0 0
      %832 = vmatpush1.bf16.xpose.msra.mxu0 0
      %833 = vmatprep.subr.bf16.mxu0 0
      %834 = vmatpush1.bf16.xpose.msra.mxu0 0
      %835 = vmatprep.subr.bf16.mxu0 0
      %836 = vmatpush1.bf16.xpose.msra.mxu0 0
      %837 = vmatprep.subr.bf16.mxu0 0
      %838 = vmatpush1.bf16.xpose.msra.mxu0 0
      %839 = vmatprep.subr.bf16.mxu0 0
      %840 = vmatpush1.bf16.xpose.msra.mxu0 0
      %841 = vmatprep.subr.bf16.mxu0 0
      %842 = vmatpush1.bf16.xpose.msra.mxu0 0
      %843 = vmatprep.subr.bf16.mxu0 0
      %844 = vmatpush1.bf16.xpose.msra.mxu0 0
      %845 = vmatprep.subr.bf16.mxu0 0
      %846 = vmatpush1.bf16.xpose.msra.mxu0 0
      %847 = vmatprep.mubr.bf16.mxu0 0
      %848 = vmatmul.mubr.bf16.gmra.mrb[0].mxu0 %v810
      %v849 = vpop.f32.mrb[0].mxu0
      %v850 = vadd.f32 0.0, %v849
      %v851 = vpop.f32.mrb[0].mxu0
      %v852 = vpop.f32.mrb[0].mxu0
      %v853 = vpop.f32.mrb[0].mxu0
      %854 = vdwg.mxu0
      %v855 = vmul.f32 %v850, 0.25
      %v856 = vsel %vm577, %v855, -1e+30
      %v857 = vsel %vm632, %v856, -inf
      %858 = vmax.xlane.f32.xlu0 %v857
      %v859 = vpop.xlane.xlu0 %858
      %v860 = vsub.f32 %v856, %v859
      %v861 = vmul.f32 %v860, 1.442695
      %v862 = vpow.pop %v861
      %v863 = vsel %vm632, %v862, 0.0
      %864 = vadd.xlane.f32.xlu0 %v863
      %v865 = vpop.xlane.xlu0 %864
      %v866 = vrcp.pop %v865
      %v867 = vmul.f32 %v862, %v866
      %v868 = vpack.c.bf16 %v867, %v867
      %869 = vrot.lane.b32.xlu0 %v579, 96
      %v870 = vpop.permute.xlu0 %869
      %v872 = vsel %vm632, %v868, 0
      %v875 = vsel %vm648, %v870, 0
      %877 = vmatprep.subr.bf16.mxu0 0
      %878 = vmatpush1.bf16.msra.mxu0 %v875
      %879 = vmatprep.subr.bf16.mxu0 0
      %880 = vmatpush1.bf16.msra.mxu0 0
      %881 = vmatprep.subr.bf16.mxu0 0
      %882 = vmatpush1.bf16.msra.mxu0 0
      %883 = vmatprep.subr.bf16.mxu0 0
      %884 = vmatpush1.bf16.msra.mxu0 0
      %885 = vmatprep.subr.bf16.mxu0 0
      %886 = vmatpush1.bf16.msra.mxu0 0
      %887 = vmatprep.subr.bf16.mxu0 0
      %888 = vmatpush1.bf16.msra.mxu0 0
      %889 = vmatprep.subr.bf16.mxu0 0
      %890 = vmatpush1.bf16.msra.mxu0 0
      %891 = vmatprep.subr.bf16.mxu0 0
      %892 = vmatpush1.bf16.msra.mxu0 0
      %893 = vmatprep.subr.bf16.mxu0 0
      %894 = vmatpush1.bf16.msra.mxu0 0
      %895 = vmatprep.subr.bf16.mxu0 0
      %896 = vmatpush1.bf16.msra.mxu0 0
      %897 = vmatprep.subr.bf16.mxu0 0
      %898 = vmatpush1.bf16.msra.mxu0 0
      %899 = vmatprep.subr.bf16.mxu0 0
      %900 = vmatpush1.bf16.msra.mxu0 0
      %901 = vmatprep.subr.bf16.mxu0 0
      %902 = vmatpush1.bf16.msra.mxu0 0
      %903 = vmatprep.subr.bf16.mxu0 0
      %904 = vmatpush1.bf16.msra.mxu0 0
      %905 = vmatprep.subr.bf16.mxu0 0
      %906 = vmatpush1.bf16.msra.mxu0 0
      %907 = vmatprep.subr.bf16.mxu0 0
      %908 = vmatpush1.bf16.msra.mxu0 0
      %909 = vmatprep.mubr.bf16.mxu0 0
      %910 = vmatmul.mubr.bf16.gmra.mrb[0].mxu0 %v872
      %v911 = vpop.f32.mrb[0].mxu0
      %v912 = vadd.f32 0.0, %v911
      %v913 = vpop.f32.mrb[0].mxu0
      %v914 = vpop.f32.mrb[0].mxu0
      %v915 = vpop.f32.mrb[0].mxu0
      %916 = vdwg.mxu0
      %917 = vrot.lane.b32.xlu0 %v578, 80
      %v918 = vpop.permute.xlu0 %917
      %919 = vrot.lane.b32.xlu0 %v578, 16
      %v920 = vpop.permute.xlu0 %919
      %v922 = vsel %vm583, %v918, 0
      %v925 = vsel %vm583, %v920, 0
      %927 = vmatprep.subr.bf16.mxu0 0
      %928 = vmatpush1.bf16.xpose.msra.mxu0 %v925
      %929 = vmatprep.subr.bf16.mxu0 0
      %930 = vmatpush1.bf16.xpose.msra.mxu0 0
      %931 = vmatprep.subr.bf16.mxu0 0
      %932 = vmatpush1.bf16.xpose.msra.mxu0 0
      %933 = vmatprep.subr.bf16.mxu0 0
      %934 = vmatpush1.bf16.xpose.msra.mxu0 0
      %935 = vmatprep.subr.bf16.mxu0 0
      %936 = vmatpush1.bf16.xpose.msra.mxu0 0
      %937 = vmatprep.subr.bf16.mxu0 0
      %938 = vmatpush1.bf16.xpose.msra.mxu0 0
      %939 = vmatprep.subr.bf16.mxu0 0
      %940 = vmatpush1.bf16.xpose.msra.mxu0 0
      %941 = vmatprep.subr.bf16.mxu0 0
      %942 = vmatpush1.bf16.xpose.msra.mxu0 0
      %943 = vmatprep.subr.bf16.mxu0 0
      %944 = vmatpush1.bf16.xpose.msra.mxu0 0
      %945 = vmatprep.subr.bf16.mxu0 0
      %946 = vmatpush1.bf16.xpose.msra.mxu0 0
      %947 = vmatprep.subr.bf16.mxu0 0
      %948 = vmatpush1.bf16.xpose.msra.mxu0 0
      %949 = vmatprep.subr.bf16.mxu0 0
      %950 = vmatpush1.bf16.xpose.msra.mxu0 0
      %951 = vmatprep.subr.bf16.mxu0 0
      %952 = vmatpush1.bf16.xpose.msra.mxu0 0
      %953 = vmatprep.subr.bf16.mxu0 0
      %954 = vmatpush1.bf16.xpose.msra.mxu0 0
      %955 = vmatprep.subr.bf16.mxu0 0
      %956 = vmatpush1.bf16.xpose.msra.mxu0 0
      %957 = vmatprep.subr.bf16.mxu0 0
      %958 = vmatpush1.bf16.xpose.msra.mxu0 0
      %959 = vmatprep.mubr.bf16.mxu0 0
      %960 = vmatmul.mubr.bf16.gmra.mrb[0].mxu0 %v922
      %v961 = vpop.f32.mrb[0].mxu0
      %v962 = vadd.f32 0.0, %v961
      %v963 = vpop.f32.mrb[0].mxu0
      %v964 = vpop.f32.mrb[0].mxu0
      %v965 = vpop.f32.mrb[0].mxu0
      %966 = vdwg.mxu0
      %v967 = vmul.f32 %v962, 0.25
      %v968 = vsel %vm577, %v967, -1e+30
      %v969 = vsel %vm632, %v968, -inf
      %970 = vmax.xlane.f32.xlu0 %v969
      %v971 = vpop.xlane.xlu0 %970
      %v972 = vsub.f32 %v968, %v971
      %v973 = vmul.f32 %v972, 1.442695
      %v974 = vpow.pop %v973
      %v975 = vsel %vm632, %v974, 0.0
      %976 = vadd.xlane.f32.xlu0 %v975
      %v977 = vpop.xlane.xlu0 %976
      %v978 = vrcp.pop %v977
      %v979 = vmul.f32 %v974, %v978
      %v980 = vpack.c.bf16 %v979, %v979
      %981 = vrot.lane.b32.xlu0 %v579, 80
      %v982 = vpop.permute.xlu0 %981
      %v984 = vsel %vm632, %v980, 0
      %v987 = vsel %vm648, %v982, 0
      %989 = vmatprep.subr.bf16.mxu0 0
      %990 = vmatpush1.bf16.msra.mxu0 %v987
      %991 = vmatprep.subr.bf16.mxu0 0
      %992 = vmatpush1.bf16.msra.mxu0 0
      %993 = vmatprep.subr.bf16.mxu0 0
      %994 = vmatpush1.bf16.msra.mxu0 0
      %995 = vmatprep.subr.bf16.mxu0 0
      %996 = vmatpush1.bf16.msra.mxu0 0
      %997 = vmatprep.subr.bf16.mxu0 0
      %998 = vmatpush1.bf16.msra.mxu0 0
      %999 = vmatprep.subr.bf16.mxu0 0
      %1000 = vmatpush1.bf16.msra.mxu0 0
      %1001 = vmatprep.subr.bf16.mxu0 0
      %1002 = vmatpush1.bf16.msra.mxu0 0
      %1003 = vmatprep.subr.bf16.mxu0 0
      %1004 = vmatpush1.bf16.msra.mxu0 0
      %1005 = vmatprep.subr.bf16.mxu0 0
      %1006 = vmatpush1.bf16.msra.mxu0 0
      %1007 = vmatprep.subr.bf16.mxu0 0
      %1008 = vmatpush1.bf16.msra.mxu0 0
      %1009 = vmatprep.subr.bf16.mxu0 0
      %1010 = vmatpush1.bf16.msra.mxu0 0
      %1011 = vmatprep.subr.bf16.mxu0 0
      %1012 = vmatpush1.bf16.msra.mxu0 0
      %1013 = vmatprep.subr.bf16.mxu0 0
      %1014 = vmatpush1.bf16.msra.mxu0 0
      %1015 = vmatprep.subr.bf16.mxu0 0
      %1016 = vmatpush1.bf16.msra.mxu0 0
      %1017 = vmatprep.subr.bf16.mxu0 0
      %1018 = vmatpush1.bf16.msra.mxu0 0
      %1019 = vmatprep.subr.bf16.mxu0 0
      %1020 = vmatpush1.bf16.msra.mxu0 0
      %1021 = vmatprep.mubr.bf16.mxu0 0
      %1022 = vmatmul.mubr.bf16.gmra.mrb[0].mxu0 %v984
      %v1023 = vpop.f32.mrb[0].mxu0
      %v1024 = vadd.f32 0.0, %v1023
      %v1025 = vpop.f32.mrb[0].mxu0
      %v1026 = vpop.f32.mrb[0].mxu0
      %v1027 = vpop.f32.mrb[0].mxu0
      %1028 = vdwg.mxu0
      %1030 = vrot.lane.b32.xlu0 %v800, 16
      %v1031 = vpop.permute.xlu0 %1030
      %1034 = vrot.lane.b32.xlu0 %v912, 32
      %v1035 = vpop.permute.xlu0 %1034
      %1038 = vrot.lane.b32.xlu0 %v1024, 48
      %v1039 = vpop.permute.xlu0 %1038
      %v1041 = vsel %vm583, %v687, %v1031
      %vm1042 = vcmask 261120
      %v1043 = vsel %vm1042, %v1041, %v1035
      %vm1044 = vcmask 392192
      %v1045 = vsel %vm1044, %v1043, %v1039
      %v1046 = vpack.c.bf16 %v1045, %v1045
      %v1047 = vld [vmem:[%s5] sm:$0xf]
      %v1048 = vld [vmem:[%s5 + $0x4] sm:$0xf]
      %v1049 = vld [vmem:[%s5 + $0x8] sm:$0xf]
      %v1050 = vld [vmem:[%s5 + $0xc] sm:$0xf]
      %v1051 = vld [vmem:[%s5 + $0x10] sm:$0xf]
      %v1052 = vld [vmem:[%s5 + $0x14] sm:$0xf]
      %v1053 = vld [vmem:[%s5 + $0x18] sm:$0xf]
      %v1054 = vld [vmem:[%s5 + $0x1c] sm:$0xf]
      %v1055 = vld [vmem:[%s6] sm:$0x1]
      %v1057 = vlaneseq
      %v1058 = vshrl.u32 %v1057, 7
      %v1059 = vsub.s32 0, %v1058
      %v1060 = vrot.slane %v1055, %v1059
      %v1070 = vunpack.c.l.b16 %v1047
      %v1071 = vunpack.c.l.b16 %v1048
      %v1072 = vunpack.c.l.b16 %v1049
      %v1073 = vunpack.c.l.b16 %v1050
      %v1074 = vunpack.c.l.b16 %v1051
      %v1075 = vunpack.c.l.b16 %v1052
      %v1076 = vunpack.c.l.b16 %v1053
      %v1077 = vunpack.c.l.b16 %v1054
      %v1078 = vpack.c.b16 %v1071, %v1070
      %v1079 = vpack.c.b16 %v1073, %v1072
      %v1080 = vpack.c.b16 %v1075, %v1074
      %v1081 = vpack.c.b16 %v1077, %v1076
      %v1087 = vsel %vm441, %v1046, 0
      %1089 = vmatprep.subr.bf16.mxu0 0
      %1090 = vmatpush1.bf16.msra.mxu0 %v1078
      %1091 = vmatprep.subr.bf16.mxu0 0
      %1092 = vmatpush1.bf16.msra.mxu0 %v1079
      %1093 = vmatprep.subr.bf16.mxu0 0
      %1094 = vmatpush1.bf16.msra.mxu0 %v1080
      %1095 = vmatprep.subr.bf16.mxu0 0
      %1096 = vmatpush1.bf16.msra.mxu0 %v1081
      %1097 = vmatprep.subr.bf16.mxu0 0
      %1098 = vmatpush1.bf16.msra.mxu0 0
      %1099 = vmatprep.subr.bf16.mxu0 0
      %1100 = vmatpush1.bf16.msra.mxu0 0
      %1101 = vmatprep.subr.bf16.mxu0 0
      %1102 = vmatpush1.bf16.msra.mxu0 0
      %1103 = vmatprep.subr.bf16.mxu0 0
      %1104 = vmatpush1.bf16.msra.mxu0 0
      %1105 = vmatprep.subr.bf16.mxu0 0
      %1106 = vmatpush1.bf16.msra.mxu0 0
      %1107 = vmatprep.subr.bf16.mxu0 0
      %1108 = vmatpush1.bf16.msra.mxu0 0
      %1109 = vmatprep.subr.bf16.mxu0 0
      %1110 = vmatpush1.bf16.msra.mxu0 0
      %1111 = vmatprep.subr.bf16.mxu0 0
      %1112 = vmatpush1.bf16.msra.mxu0 0
      %1113 = vmatprep.subr.bf16.mxu0 0
      %1114 = vmatpush1.bf16.msra.mxu0 0
      %1115 = vmatprep.subr.bf16.mxu0 0
      %1116 = vmatpush1.bf16.msra.mxu0 0
      %1117 = vmatprep.subr.bf16.mxu0 0
      %1118 = vmatpush1.bf16.msra.mxu0 0
      %1119 = vmatprep.subr.bf16.mxu0 0
      %1120 = vmatpush1.bf16.msra.mxu0 0
      %1121 = vmatprep.mubr.bf16.mxu0 0
      %1122 = vmatmul.mubr.bf16.gmra.mrb[0].mxu0 %v1087
      %v1123 = vpop.f32.mrb[0].mxu0
      %v1124 = vadd.f32 %v1060, %v1123
      %v1125 = vpop.f32.mrb[0].mxu0
      %v1126 = vpop.f32.mrb[0].mxu0
      %v1127 = vpop.f32.mrb[0].mxu0
      %1128 = vdwg.mxu0
      %v1129 = vadd.f32 %v438, %v1124
      %v1130 = vld [vmem:[%s7] sm:$0x1]
      %v1131 = vld [vmem:[%s8] sm:$0x1]
      %v1132 = vsel %vm441, %v1129, 0.0
      %1133 = vadd.xlane.f32.xlu0 %v1132
      %v1134 = vpop.xlane.xlu0 %1133
      %v1135 = vmul.f32 %v1134, %v445
      %v1136 = vsub.f32 %v1129, %v1135
      %v1137 = vmul.f32 %v1136, %v1136
      %v1138 = vsel %vm441, %v1137, 0.0
      %1139 = vadd.xlane.f32.xlu0 %v1138
      %v1140 = vpop.xlane.xlu0 %1139
      %v1141 = vmul.f32 %v1140, %v445
      %v1142 = vadd.f32 %v1141, 1e-06
      %v1143 = vrsqrt.pop %v1142
      %v1144 = vmul.f32 %v1136, %v1143
      %v1146 = vlaneseq
      %v1147 = vshrl.u32 %v1146, 7
      %v1148 = vsub.s32 0, %v1147
      %v1149 = vrot.slane %v1130, %v1148
      %v1151 = vmul.f32 %v1144, %v1149
      %v1153 = vlaneseq
      %v1154 = vshrl.u32 %v1153, 7
      %v1155 = vsub.s32 0, %v1154
      %v1156 = vrot.slane %v1131, %v1155
      %v1158 = vadd.f32 %v1151, %v1156
      %v1159 = vpack.c.bf16 %v1158, %v1158
      %v1160 = vld [vmem:[%s9] sm:$0xff]
      %v1161 = vld [vmem:[%s9 + $0x8] sm:$0xff]
      %v1162 = vld [vmem:[%s9 + $0x10] sm:$0xff]
      %v1163 = vld [vmem:[%s9 + $0x18] sm:$0xff]
      %v1164 = vld [vmem:[%s9 + $0x20] sm:$0xff]
      %v1165 = vld [vmem:[%s9 + $0x28] sm:$0xff]
      %v1166 = vld [vmem:[%s9 + $0x30] sm:$0xff]
      %v1167 = vld [vmem:[%s9 + $0x38] sm:$0xff]
      %v1168 = vld [vmem:[%s10] sm:$0x3]
      %v1170 = vlaneseq
      %v1171 = vshrl.u32 %v1170, 7
      %v1172 = vsub.s32 0, %v1171
      %v1173 = vrot.slane %v1168, %v1172
      %v1174 = vlaneseq
      %v1175 = vshrl.u32 %v1174, 7
      %v1176 = vsub.s32 1, %v1175
      %v1177 = vrot.slane %v1168, %v1176
      %v1188 = vunpack.c.l.b16 %v1160
      %v1189 = vunpack.c.h.b16 %v1160
      %v1190 = vunpack.c.l.b16 %v1161
      %v1191 = vunpack.c.h.b16 %v1161
      %v1192 = vunpack.c.l.b16 %v1162
      %v1193 = vunpack.c.h.b16 %v1162
      %v1194 = vunpack.c.l.b16 %v1163
      %v1195 = vunpack.c.h.b16 %v1163
      %v1196 = vunpack.c.l.b16 %v1164
      %v1197 = vunpack.c.h.b16 %v1164
      %v1198 = vunpack.c.l.b16 %v1165
      %v1199 = vunpack.c.h.b16 %v1165
      %v1200 = vunpack.c.l.b16 %v1166
      %v1201 = vunpack.c.h.b16 %v1166
      %v1202 = vunpack.c.l.b16 %v1167
      %v1203 = vunpack.c.h.b16 %v1167
      %v1204 = vpack.c.b16 %v1190, %v1188
      %v1205 = vpack.c.b16 %v1191, %v1189
      %v1206 = vpack.c.b16 %v1194, %v1192
      %v1207 = vpack.c.b16 %v1195, %v1193
      %v1208 = vpack.c.b16 %v1198, %v1196
      %v1209 = vpack.c.b16 %v1199, %v1197
      %v1210 = vpack.c.b16 %v1202, %v1200
      %v1211 = vpack.c.b16 %v1203, %v1201
      %v1221 = vsel %vm441, %v1159, 0
      %1223 = vmatprep.subr.bf16.mxu0 %v1205
      %1224 = vmatpush1.bf16.msra.mxu0 %v1204
      %1225 = vmatprep.subr.bf16.mxu0 %v1207
      %1226 = vmatpush1.bf16.msra.mxu0 %v1206
      %1227 = vmatprep.subr.bf16.mxu0 %v1209
      %1228 = vmatpush1.bf16.msra.mxu0 %v1208
      %1229 = vmatprep.subr.bf16.mxu0 %v1211
      %1230 = vmatpush1.bf16.msra.mxu0 %v1210
      %1231 = vmatprep.subr.bf16.mxu0 0
      %1232 = vmatpush1.bf16.msra.mxu0 0
      %1233 = vmatprep.subr.bf16.mxu0 0
      %1234 = vmatpush1.bf16.msra.mxu0 0
      %1235 = vmatprep.subr.bf16.mxu0 0
      %1236 = vmatpush1.bf16.msra.mxu0 0
      %1237 = vmatprep.subr.bf16.mxu0 0
      %1238 = vmatpush1.bf16.msra.mxu0 0
      %1239 = vmatprep.subr.bf16.mxu0 0
      %1240 = vmatpush1.bf16.msra.mxu0 0
      %1241 = vmatprep.subr.bf16.mxu0 0
      %1242 = vmatpush1.bf16.msra.mxu0 0
      %1243 = vmatprep.subr.bf16.mxu0 0
      %1244 = vmatpush1.bf16.msra.mxu0 0
      %1245 = vmatprep.subr.bf16.mxu0 0
      %1246 = vmatpush1.bf16.msra.mxu0 0
      %1247 = vmatprep.subr.bf16.mxu0 0
      %1248 = vmatpush1.bf16.msra.mxu0 0
      %1249 = vmatprep.subr.bf16.mxu0 0
      %1250 = vmatpush1.bf16.msra.mxu0 0
      %1251 = vmatprep.subr.bf16.mxu0 0
      %1252 = vmatpush1.bf16.msra.mxu0 0
      %1253 = vmatprep.subr.bf16.mxu0 0
      %1254 = vmatpush1.bf16.msra.mxu0 0
      %1255 = vmatprep.mubr.bf16.mxu0 0
      %1256 = vmatmul.mubr.bf16.gmra.mrb[0].mxu0 %v1221
      %v1257 = vpop.f32.mrb[0].mxu0
      %v1258 = vadd.f32 %v1173, %v1257
      %v1259 = vpop.f32.mrb[0].mxu0
      %v1260 = vadd.f32 %v1177, %v1259
      %v1261 = vpop.f32.mrb[0].mxu0
      %v1262 = vpop.f32.mrb[0].mxu0
      %1263 = vdwg.mxu0
      %v1264 = vmul.f32 %v1258, 0.5
      %v1265 = vmul.f32 %v1260, 0.5
      %v1266 = vmul.f32 %v1258, 0.70710677
      %v1267 = vmul.f32 %v1260, 0.70710677
      %v1268 = verf.f32.pop %v1266
      %v1269 = verf.f32.pop %v1267
      %v1270 = vadd.f32 %v1268, 1.0
      %v1271 = vadd.f32 %v1269, 1.0
      %v1272 = vmul.f32 %v1264, %v1270
      %v1273 = vmul.f32 %v1265, %v1271
      %v1274 = vpack.c.bf16 %v1272, %v1272
      %v1275 = vpack.c.bf16 %v1273, %v1273
      %v1276 = vld [vmem:[%s11] sm:$0xf]
      %v1277 = vld [vmem:[%s11 + $0x4] sm:$0xf]
      %v1278 = vld [vmem:[%s11 + $0x8] sm:$0xf]
      %v1279 = vld [vmem:[%s11 + $0xc] sm:$0xf]
      %v1280 = vld [vmem:[%s11 + $0x10] sm:$0xf]
      %v1281 = vld [vmem:[%s11 + $0x14] sm:$0xf]
      %v1282 = vld [vmem:[%s11 + $0x18] sm:$0xf]
      %v1283 = vld [vmem:[%s11 + $0x1c] sm:$0xf]
      %v1284 = vld [vmem:[%s11 + $0x20] sm:$0xf]
      %v1285 = vld [vmem:[%s11 + $0x24] sm:$0xf]
      %v1286 = vld [vmem:[%s11 + $0x28] sm:$0xf]
      %v1287 = vld [vmem:[%s11 + $0x2c] sm:$0xf]
      %v1288 = vld [vmem:[%s11 + $0x30] sm:$0xf]
      %v1289 = vld [vmem:[%s11 + $0x34] sm:$0xf]
      %v1290 = vld [vmem:[%s11 + $0x38] sm:$0xf]
      %v1291 = vld [vmem:[%s11 + $0x3c] sm:$0xf]
      %v1292 = vld [vmem:[%s11 + $0x40] sm:$0xf]
      %v1293 = vld [vmem:[%s11 + $0x44] sm:$0xf]
      %v1294 = vld [vmem:[%s11 + $0x48] sm:$0xf]
      %v1295 = vld [vmem:[%s11 + $0x4c] sm:$0xf]
      %v1296 = vld [vmem:[%s11 + $0x50] sm:$0xf]
      %v1297 = vld [vmem:[%s11 + $0x54] sm:$0xf]
      %v1298 = vld [vmem:[%s11 + $0x58] sm:$0xf]
      %v1299 = vld [vmem:[%s11 + $0x5c] sm:$0xf]
      %v1300 = vld [vmem:[%s11 + $0x60] sm:$0xf]
      %v1301 = vld [vmem:[%s11 + $0x64] sm:$0xf]
      %v1302 = vld [vmem:[%s11 + $0x68] sm:$0xf]
      %v1303 = vld [vmem:[%s11 + $0x6c] sm:$0xf]
      %v1304 = vld [vmem:[%s11 + $0x70] sm:$0xf]
      %v1305 = vld [vmem:[%s11 + $0x74] sm:$0xf]
      %v1306 = vld [vmem:[%s11 + $0x78] sm:$0xf]
      %v1307 = vld [vmem:[%s11 + $0x7c] sm:$0xf]
      %v1308 = vld [vmem:[%s12] sm:$0x1]
      %v1310 = vlaneseq
      %v1311 = vshrl.u32 %v1310, 7
      %v1312 = vsub.s32 0, %v1311
      %v1313 = vrot.slane %v1308, %v1312
      %v1347 = vunpack.c.l.b16 %v1276
      %v1348 = vunpack.c.l.b16 %v1277
      %v1349 = vunpack.c.l.b16 %v1278
      %v1350 = vunpack.c.l.b16 %v1279
      %v1351 = vunpack.c.l.b16 %v1280
      %v1352 = vunpack.c.l.b16 %v1281
      %v1353 = vunpack.c.l.b16 %v1282
      %v1354 = vunpack.c.l.b16 %v1283
      %v1355 = vunpack.c.l.b16 %v1284
      %v1356 = vunpack.c.l.b16 %v1285
      %v1357 = vunpack.c.l.b16 %v1286
      %v1358 = vunpack.c.l.b16 %v1287
      %v1359 = vunpack.c.l.b16 %v1288
      %v1360 = vunpack.c.l.b16 %v1289
      %v1361 = vunpack.c.l.b16 %v1290
      %v1362 = vunpack.c.l.b16 %v1291
      %v1363 = vunpack.c.l.b16 %v1292
      %v1364 = vunpack.c.l.b16 %v1293
      %v1365 = vunpack.c.l.b16 %v1294
      %v1366 = vunpack.c.l.b16 %v1295
      %v1367 = vunpack.c.l.b16 %v1296
      %v1368 = vunpack.c.l.b16 %v1297
      %v1369 = vunpack.c.l.b16 %v1298
      %v1370 = vunpack.c.l.b16 %v1299
      %v1371 = vunpack.c.l.b16 %v1300
      %v1372 = vunpack.c.l.b16 %v1301
      %v1373 = vunpack.c.l.b16 %v1302
      %v1374 = vunpack.c.l.b16 %v1303
      %v1375 = vunpack.c.l.b16 %v1304
      %v1376 = vunpack.c.l.b16 %v1305
      %v1377 = vunpack.c.l.b16 %v1306
      %v1378 = vunpack.c.l.b16 %v1307
      %v1379 = vpack.c.b16 %v1348, %v1347
      %v1380 = vpack.c.b16 %v1350, %v1349
      %v1381 = vpack.c.b16 %v1352, %v1351
      %v1382 = vpack.c.b16 %v1354, %v1353
      %v1383 = vpack.c.b16 %v1356, %v1355
      %v1384 = vpack.c.b16 %v1358, %v1357
      %v1385 = vpack.c.b16 %v1360, %v1359
      %v1386 = vpack.c.b16 %v1362, %v1361
      %v1387 = vpack.c.b16 %v1364, %v1363
      %v1388 = vpack.c.b16 %v1366, %v1365
      %v1389 = vpack.c.b16 %v1368, %v1367
      %v1390 = vpack.c.b16 %v1370, %v1369
      %v1391 = vpack.c.b16 %v1372, %v1371
      %v1392 = vpack.c.b16 %v1374, %v1373
      %v1393 = vpack.c.b16 %v1376, %v1375
      %v1394 = vpack.c.b16 %v1378, %v1377
      %1411 = vmatprep.subr.bf16.mxu0 0
      %1412 = vmatpush1.bf16.msra.mxu0 %v1379
      %1413 = vmatprep.subr.bf16.mxu0 0
      %1414 = vmatpush1.bf16.msra.mxu0 %v1380
      %1415 = vmatprep.subr.bf16.mxu0 0
      %1416 = vmatpush1.bf16.msra.mxu0 %v1381
      %1417 = vmatprep.subr.bf16.mxu0 0
      %1418 = vmatpush1.bf16.msra.mxu0 %v1382
      %1419 = vmatprep.subr.bf16.mxu0 0
      %1420 = vmatpush1.bf16.msra.mxu0 %v1383
      %1421 = vmatprep.subr.bf16.mxu0 0
      %1422 = vmatpush1.bf16.msra.mxu0 %v1384
      %1423 = vmatprep.subr.bf16.mxu0 0
      %1424 = vmatpush1.bf16.msra.mxu0 %v1385
      %1425 = vmatprep.subr.bf16.mxu0 0
      %1426 = vmatpush1.bf16.msra.mxu0 %v1386
      %1427 = vmatprep.subr.bf16.mxu0 0
      %1428 = vmatpush1.bf16.msra.mxu0 %v1387
      %1429 = vmatprep.subr.bf16.mxu0 0
      %1430 = vmatpush1.bf16.msra.mxu0 %v1388
      %1431 = vmatprep.subr.bf16.mxu0 0
      %1432 = vmatpush1.bf16.msra.mxu0 %v1389
      %1433 = vmatprep.subr.bf16.mxu0 0
      %1434 = vmatpush1.bf16.msra.mxu0 %v1390
      %1435 = vmatprep.subr.bf16.mxu0 0
      %1436 = vmatpush1.bf16.msra.mxu0 %v1391
      %1437 = vmatprep.subr.bf16.mxu0 0
      %1438 = vmatpush1.bf16.msra.mxu0 %v1392
      %1439 = vmatprep.subr.bf16.mxu0 0
      %1440 = vmatpush1.bf16.msra.mxu0 %v1393
      %1441 = vmatprep.subr.bf16.mxu0 0
      %1442 = vmatpush1.bf16.msra.mxu0 %v1394
      %1443 = vmatprep.mubr.bf16.mxu0 %v1275
      %1444 = vmatmul.mubr.bf16.gmra.mrb[0].mxu0 %v1274
      %v1445 = vpop.f32.mrb[0].mxu0
      %v1446 = vadd.f32 %v1313, %v1445
      %v1447 = vpop.f32.mrb[0].mxu0
      %v1448 = vpop.f32.mrb[0].mxu0
      %v1449 = vpop.f32.mrb[0].mxu0
      %1450 = vdwg.mxu0
      %v1451 = vadd.f32 %v1129, %v1446
      %v1452 = vpack.c.bf16 %v1451, %v1451
      %vm1453 = vcmask 519168
      %1454 = vst.msk [vmem:[%s435] sm:$0xf] %vm1453, %v1452
      %p1455 = scmp.lt.s32.totalorder %s24, 1
      %s1456 = scalar_select %p1455, %s24, 1
      %s1457 = smul.addr %s1456, 4
      %s1458 = scalar_lea.vmem %s13, %s1457
      // Predicated region
      $region73: #{biomedclip_forward.5} parent=71 // pred_check
        %p1459 = pneg %p320
      $region74: #{biomedclip_forward.5} parent=71 // pred_check_branch
        %1461 = sbr.rel (%p1459) target = $region76
      $region75: #{biomedclip_forward.5} parent=71 // pred_region
        _
      $region76: #{biomedclip_forward.5} parent=71 // pred_fallthru
        _
    $region72: #{biomedclip_forward.5} parent=5 // pred_fallthru
      _
    %p1462 = scmp.le.s32.totalorder 2, %s19
    // Predicated region
    $region77: #{biomedclip_forward.5} parent=5 // pred_check
      %p1463 = pneg %p1462
    $region78: #{biomedclip_forward.5} parent=5 // pred_check_branch
      %1465 = sbr.rel (%p1463) target = $region80
    $region79: #{biomedclip_forward.5} parent=5 // pred_region
      %s1466 = ssub.s32 %s19, 2
      // Predicated region
      $region81: #{biomedclip_forward.5} parent=79 // pred_check
        %p1467 = pneg %p326
      $region82: #{biomedclip_forward.5} parent=79 // pred_check_branch
        %1469 = sbr.rel (%p1467) target = $region84
      $region83: #{biomedclip_forward.5} parent=79 // pred_region
        %p1470 = scmp.lt.s32.totalorder %s25, 1
        %s1471 = scalar_select %p1470, %s25, 1
        %s1472 = smul.addr %s1471, 4
        %s1473 = scalar_lea.vmem %s13, %s1472
      $region84: #{biomedclip_forward.5} parent=79 // pred_fallthru
        _
    $region80: #{biomedclip_forward.5} parent=5 // pred_fallthru
      _
  $region6: #{biomedclip_forward.5} parent=0 // loop_footer
    %s23 = sadd.s32 1, %s19
  $region7: #{biomedclip_forward.5} parent=0 // loop_footer_branch
    %18 = sbr.rel target = $region3
  $region8: #{biomedclip_forward.5} parent=0 // loop_exit
    _

</llo_original>
